<compile_context>
chip_gen: v5e
topology: v5e:2x2
jax: 0.10.0
libtpu: 0.0.40
codegen_flags: <defaults>
</compile_context>

<pallas_src>
import math

import jax
import jax.numpy as jnp
from jax import lax
from jax.experimental import pallas as pl
from jax.experimental.pallas import tpu as pltpu


def _vmem_limit_bytes():
    """~75% of this generation's VMEM (leave headroom, esp. v7x's 64 MiB)."""
    try:
        info = pltpu.get_tpu_info()
        cap = getattr(info, "vmem_capacity_bytes", None)
        if cap:
            return int(cap) * 3 // 4
    except Exception:
        pass
    return 48 * 1024 * 1024  # conservative default that fits v7x


# --------------------------------------------------------------------------- #
# Stage A: K/V projection into per-head layouts.
# --------------------------------------------------------------------------- #
def kv_proj_kernel(k_ref, v_ref, wk_ref, wv_ref, bk_ref, bv_ref, kp_ref, vp_ref):
    """Project one (TKV, E) tile of K/V.

    kp_ref[h] = (k_tile @ Wk_h^T)^T -> (D, TKV)   (K^T per head, ready for QK^T)
    vp_ref[h] =  v_tile @ Wv_h^T    -> (TKV, D)
    """
    k_in = k_ref[...]                                   # (TKV, E)
    v_in = v_ref[...]                                   # (TKV, E)
    num_heads = kp_ref.shape[0]
    for h in range(num_heads):                          # static; one-time projection cost
        # wk_ref[h] is (D, E); contract E with E  ->  (D, TKV)  (no in-loop transpose later)
        kp_ref[h] = (lax.dot_general(
            wk_ref[h], k_in, (((1,), (1,)), ((), ())),
            preferred_element_type=jnp.float32) + bk_ref[h]).astype(kp_ref.dtype)
        # wv_ref[h] is (E, D); plain NN matmul  ->  (TKV, D)
        vp_ref[h] = (jnp.dot(v_in, wv_ref[h], preferred_element_type=jnp.float32)
                     + bv_ref[h]).astype(vp_ref.dtype)


# --------------------------------------------------------------------------- #
# Stage B: attention + fused output projection per query block.
# --------------------------------------------------------------------------- #
def attn_kernel(q_ref, kp_ref, vp_ref, wq_ref, wo_ref, bq_ref, bo_ref,
                out_ref, acc_ref):
    acc_ref[...] = jnp.zeros_like(acc_ref)              # (TQ, E) f32 accumulator
    q_in = q_ref[...]                                   # (TQ, E), compute dtype
    cdt = q_in.dtype
    num_heads = kp_ref.shape[0]

    def head_body(h, carry):
        # Q projection for this head (1/sqrt(D) already folded into wq/bq).
        qh = (jnp.dot(q_in, wq_ref[h], preferred_element_type=jnp.float32)
              + bq_ref[h]).astype(cdt)                               # (TQ, D)
        # Scores: K stored pre-transposed per head -> plain NN MXU matmul.
        s = jnp.dot(qh, kp_ref[h], preferred_element_type=jnp.float32)   # (TQ, S_kv)
        # Numerically stable softmax in f32.
        m = jnp.max(s, axis=-1, keepdims=True)
        e = jnp.exp(s - m)
        denom = jnp.sum(e, axis=-1, keepdims=True)                   # (TQ, 1)
        # Unnormalized PV, then exact normalization of the narrow result.
        ah = jnp.dot(e.astype(cdt), vp_ref[h],
                     preferred_element_type=jnp.float32)             # (TQ, D)
        ah = ah / denom
        # Fused output projection: acc += attn_h @ Wo^T rows of head h.
        acc_ref[...] += jnp.dot(ah.astype(cdt), wo_ref[h],
                                preferred_element_type=jnp.float32)  # (TQ, E)
        return carry

    lax.fori_loop(0, num_heads, head_body, 0)
    out_ref[...] = (acc_ref[...] + bo_ref[...]).astype(out_ref.dtype)


# --------------------------------------------------------------------------- #
# Wrapper
# --------------------------------------------------------------------------- #
def _mha_forward(q, k, v, params, *, num_heads, q_block_size, kv_block_size,
                 compute_dtype, single_buffer_constants):
    B, S_q, E = q.shape
    S_kv = k.shape[1]
    assert E % num_heads == 0, "emb_dim must be divisible by num_heads"
    D = E // num_heads
    scale = 1.0 / math.sqrt(D)
    cdt = compute_dtype
    out_dtype = q.dtype
    vmem_limit = _vmem_limit_bytes()

    # PyTorch Linear: y = x @ W^T + b.  Build per-head weight layouts once.
    def in_proj(w):                                      # (E, E) -> (H, E, D)
        return jnp.transpose(jnp.reshape(w.T, (E, num_heads, D)), (1, 0, 2))

    wq_h = (in_proj(params["wq"]) * scale).astype(cdt)   # (H, E, D), scale folded
    wv_h = in_proj(params["wv"]).astype(cdt)             # (H, E, D)
    wk_h = jnp.reshape(params["wk"], (num_heads, D, E)).astype(cdt)      # (H, D, E)
    wo_h = jnp.reshape(params["wo"].T, (num_heads, D, E)).astype(cdt)    # (H, D, E)

    bq_h = (params["bq"] * scale).reshape(num_heads, 1, D).astype(jnp.float32)
    bk_h = params["bk"].reshape(num_heads, D, 1).astype(jnp.float32)
    bv_h = params["bv"].reshape(num_heads, 1, D).astype(jnp.float32)
    bo_2 = params["bo"].reshape(1, E).astype(jnp.float32)

    q_c = q.astype(cdt)
    k_c = k.astype(cdt)
    v_c = v.astype(cdt)

    def const_spec(block_shape, index_map):
        # Single-buffer blocks whose index is constant along the inner grid axis.
        if single_buffer_constants:
            return pl.BlockSpec(block_shape, index_map, pipeline_mode=pl.Buffered(1))
        return pl.BlockSpec(block_shape, index_map)

    # ---------------------------- Stage A: K/V projection -------------------
    if (S_kv % kv_block_size == 0) and (kv_block_size < S_kv) and (kv_block_size % 128 == 0):
        tkv = kv_block_size
    else:
        tkv = S_kv
    nkv = S_kv // tkv

    kp, vp = pl.pallas_call(
        kv_proj_kernel,
        out_shape=(jax.ShapeDtypeStruct((B, num_heads, D, S_kv), cdt),
                   jax.ShapeDtypeStruct((B, num_heads, S_kv, D), cdt)),
        grid_spec=pltpu.PrefetchScalarGridSpec(
            num_scalar_prefetch=0,
            grid=(B, nkv),
            in_specs=[
                pl.BlockSpec((None, tkv, E), lambda b, t: (b, t, 0)),
                pl.BlockSpec((None, tkv, E), lambda b, t: (b, t, 0)),
                const_spec((num_heads, D, E), lambda b, t: (0, 0, 0)),
                const_spec((num_heads, E, D), lambda b, t: (0, 0, 0)),
                const_spec((num_heads, D, 1), lambda b, t: (0, 0, 0)),
                const_spec((num_heads, 1, D), lambda b, t: (0, 0, 0)),
            ],
            out_specs=(
                pl.BlockSpec((None, num_heads, D, tkv), lambda b, t: (b, 0, 0, t)),
                pl.BlockSpec((None, num_heads, tkv, D), lambda b, t: (b, 0, t, 0)),
            ),
        ),
        compiler_params=pltpu.CompilerParams(
            dimension_semantics=("parallel", "parallel"),
            vmem_limit_bytes=vmem_limit),
    )(k_c, v_c, wk_h, wv_h, bk_h, bv_h)

    # ---------------------------- Stage B: attention ------------------------
    if S_q <= q_block_size:
        tq = S_q
    else:
        tq = max(8, (q_block_size // 8) * 8)
    s_q_pad = ((S_q + tq - 1) // tq) * tq
    q_in = q_c if s_q_pad == S_q else jnp.pad(
        q_c, ((0, 0), (0, s_q_pad - S_q), (0, 0)))
    nq = s_q_pad // tq

    out = pl.pallas_call(
        attn_kernel,
        out_shape=jax.ShapeDtypeStruct((B, s_q_pad, E), out_dtype),
        grid_spec=pltpu.PrefetchScalarGridSpec(
            num_scalar_prefetch=0,
            grid=(B, nq),
            in_specs=[
                pl.BlockSpec((None, tq, E), lambda b, j: (b, j, 0)),
                const_spec((None, num_heads, D, S_kv), lambda b, j: (b, 0, 0, 0)),
                const_spec((None, num_heads, S_kv, D), lambda b, j: (b, 0, 0, 0)),
                const_spec((num_heads, E, D), lambda b, j: (0, 0, 0)),
                const_spec((num_heads, D, E), lambda b, j: (0, 0, 0)),
                const_spec((num_heads, 1, D), lambda b, j: (0, 0, 0)),
                const_spec((1, E), lambda b, j: (0, 0)),
            ],
            out_specs=pl.BlockSpec((None, tq, E), lambda b, j: (b, j, 0)),
            scratch_shapes=[pltpu.VMEM((tq, E), jnp.float32)],
        ),
        compiler_params=pltpu.CompilerParams(
            dimension_semantics=("parallel", "parallel"),
            vmem_limit_bytes=vmem_limit),
    )(q_in, kp, vp, wq_h, wo_h, bq_h, bo_2)

    if s_q_pad != S_q:
        out = out[:, :S_q, :]
    return out


def multi_head_attention(q, k, v, params, *, num_heads, q_block_size=256,
                         kv_block_size=512, compute_dtype=jnp.bfloat16):
    """Forward pass of the PyTorch MultiHeadAttention module."""
    kwargs = dict(num_heads=num_heads, q_block_size=q_block_size,
                  kv_block_size=kv_block_size, compute_dtype=compute_dtype)
    try:
        return _mha_forward(q, k, v, params, single_buffer_constants=True, **kwargs)
    except Exception:
        # Some jaxlib versions may reject pl.Buffered(1); retry with default
        # (double) buffering — functionally identical, just uses more VMEM.
        return _mha_forward(q, k, v, params, single_buffer_constants=False, **kwargs)


# --------------------------------------------------------------------------- #
# Pure-JAX reference mirroring the PyTorch forward (f32).
# --------------------------------------------------------------------------- #
def reference_mha(q, k, v, params, *, num_heads):
    B, S, E = q.shape
    D = E // num_heads

    def lin(x, w, b):
        return jnp.einsum("bse,oe->bso", x, w) + b

    def split(x):
        return x.reshape(B, S, num_heads, D).transpose(0, 2, 1, 3)

    Q = split(lin(q, params["wq"], params["bq"]))
    K = split(lin(k, params["wk"], params["bk"]))
    V = split(lin(v, params["wv"], params["bv"]))

    scores = jnp.einsum("bhqd,bhkd->bhqk", Q, K) / math.sqrt(D)
    probs = jax.nn.softmax(scores, axis=-1)
    attn = jnp.einsum("bhqk,bhkd->bhqd", probs, V)
    attn = attn.transpose(0, 2, 1, 3).reshape(B, S, E)
    return jnp.einsum("bse,oe->bso", attn, params["wo"]) + params["bo"]


def init_params(key, emb_dim):
    keys = jax.random.split(key, 8)
    bound = 1.0 / math.sqrt(emb_dim)

    def u(k, shape):
        return jax.random.uniform(k, shape, jnp.float32, -bound, bound)

    return {
        "wq": u(keys[0], (emb_dim, emb_dim)), "bq": u(keys[1], (emb_dim,)),
        "wk": u(keys[2], (emb_dim, emb_dim)), "bk": u(keys[3], (emb_dim,)),
        "wv": u(keys[4], (emb_dim, emb_dim)), "bv": u(keys[5], (emb_dim,)),
        "wo": u(keys[6], (emb_dim, emb_dim)), "bo": u(keys[7], (emb_dim,)),
    }


if __name__ == "__main__":
    B, S, E, H = 2, 8, 32, 4

    key = jax.random.PRNGKey(0)
    kq, kk, kv, kp = jax.random.split(key, 4)
    q = jax.random.normal(kq, (B, S, E), jnp.float32)
    k = jax.random.normal(kk, (B, S, E), jnp.float32)
    v = jax.random.normal(kv, (B, S, E), jnp.float32)
    params = init_params(kp, E)

    ref = reference_mha(q, k, v, params, num_heads=H)

    # Default bf16 MXU fast path (f32 accumulation / f32 softmax).
    out = multi_head_attention(q, k, v, params, num_heads=H)
    out = jax.block_until_ready(out)
    assert out.shape == (B, S, E)
    assert jnp.allclose(out, ref, atol=5e-2, rtol=5e-2), "bf16 path mismatch vs reference"

    # Optional f32 compute path for tight parity with the PyTorch reference.
    out_f32 = multi_head_attention(q, k, v, params, num_heads=H,
                                   compute_dtype=jnp.float32)
    out_f32 = jax.block_until_ready(out_f32)
    assert jnp.allclose(out_f32, ref, atol=1e-3, rtol=1e-3), "f32 path mismatch vs reference"

    print("KERNEL_OK")
</pallas_src>

<mosaic_0001>
module attributes {stable_mosaic.version = 11 : i64} {
  func.func @kv_proj_kernel(%arg0: i32, %arg1: i32, %arg2: memref<1x8x32xbf16, #tpu.memory_space<vmem>>, %arg3: memref<1x8x32xbf16, #tpu.memory_space<vmem>>, %arg4: memref<4x8x32xbf16, #tpu.memory_space<vmem>>, %arg5: memref<4x32x8xbf16, #tpu.memory_space<vmem>>, %arg6: memref<4x8x1xf32, #tpu.memory_space<vmem>>, %arg7: memref<4x1x8xf32, #tpu.memory_space<vmem>>, %arg8: memref<1x4x8x8xbf16, #tpu.memory_space<vmem>>, %arg9: memref<1x4x8x8xbf16, #tpu.memory_space<vmem>>) attributes {dimension_semantics = [#tpu.dimension_semantics<parallel>, #tpu.dimension_semantics<parallel>], iteration_bounds = array<i64: 2, 1>, scalar_prefetch = 0 : i64, scratch_operands = 0 : i64, tpu.core_type = #tpu.core_type<tc>, window_params = [{transform_indices = @transform_0, window_bounds = array<i64: 1, 8, 32>}, {transform_indices = @transform_1, window_bounds = array<i64: 1, 8, 32>}, {pipeline_mode = #tpu.pipeline_mode<synchronous>, transform_indices = @transform_2, window_bounds = array<i64: 4, 8, 32>}, {pipeline_mode = #tpu.pipeline_mode<synchronous>, transform_indices = @transform_3, window_bounds = array<i64: 4, 32, 8>}, {pipeline_mode = #tpu.pipeline_mode<synchronous>, transform_indices = @transform_4, window_bounds = array<i64: 4, 8, 1>}, {pipeline_mode = #tpu.pipeline_mode<synchronous>, transform_indices = @transform_5, window_bounds = array<i64: 4, 1, 8>}, {transform_indices = @transform_6, window_bounds = array<i64: 1, 4, 8, 8>}, {transform_indices = @transform_7, window_bounds = array<i64: 1, 4, 8, 8>}]} {
    %c0 = arith.constant 0 : index
    %c0_0 = arith.constant 0 : index
    %c0_1 = arith.constant 0 : index
    %0 = vector.load %arg2[%c0, %c0_0, %c0_1] : memref<1x8x32xbf16, #tpu.memory_space<vmem>>, vector<1x8x32xbf16>
    %1 = vector.shape_cast %0 : vector<1x8x32xbf16> to vector<8x32xbf16>
    %c0_2 = arith.constant 0 : index
    %c0_3 = arith.constant 0 : index
    %c0_4 = arith.constant 0 : index
    %2 = vector.load %arg3[%c0_2, %c0_3, %c0_4] : memref<1x8x32xbf16, #tpu.memory_space<vmem>>, vector<1x8x32xbf16>
    %3 = vector.shape_cast %2 : vector<1x8x32xbf16> to vector<8x32xbf16>
    %c0_5 = arith.constant 0 : index
    %c0_6 = arith.constant 0 : index
    %c0_7 = arith.constant 0 : index
    %4 = vector.load %arg4[%c0_5, %c0_6, %c0_7] : memref<4x8x32xbf16, #tpu.memory_space<vmem>>, vector<1x8x32xbf16>
    %5 = vector.shape_cast %4 : vector<1x8x32xbf16> to vector<8x32xbf16>
    %cst = arith.constant dense<0.000000e+00> : vector<8x8xf32>
    %6 = tpu.matmul %5, %1, %cst {dimension_numbers = #tpu.dot_dimension_numbers<[1], [1], [0], [0], [0, 0, 1, 0], [], []>} : vector<8x32xbf16>, vector<8x32xbf16>, vector<8x8xf32> -> vector<8x8xf32>
    %c0_8 = arith.constant 0 : index
    %c0_9 = arith.constant 0 : index
    %c0_10 = arith.constant 0 : index
    %7 = vector.load %arg6[%c0_8, %c0_9, %c0_10] : memref<4x8x1xf32, #tpu.memory_space<vmem>>, vector<1x8x1xf32>
    %8 = vector.shape_cast %7 : vector<1x8x1xf32> to vector<8x1xf32>
    %9 = vector.broadcast %8 : vector<8x1xf32> to vector<8x8xf32>
    %10 = arith.addf %6, %9 : vector<8x8xf32>
    %11 = arith.truncf %10 : vector<8x8xf32> to vector<8x8xbf16>
    %c0_11 = arith.constant 0 : index
    %c0_12 = arith.constant 0 : index
    %c0_13 = arith.constant 0 : index
    %c0_14 = arith.constant 0 : index
    %12 = vector.load %arg8[%c0_11, %c0_12, %c0_13, %c0_14] : memref<1x4x8x8xbf16, #tpu.memory_space<vmem>>, vector<1x1x8x8xbf16>
    %13 = vector.shape_cast %12 : vector<1x1x8x8xbf16> to vector<8x8xbf16>
    %14 = vector.shape_cast %11 : vector<8x8xbf16> to vector<1x1x8x8xbf16>
    tpu.vector_store %arg8[%c0_11, %c0_12, %c0_13, %c0_14], %14 {strides = array<i32>} : memref<1x4x8x8xbf16, #tpu.memory_space<vmem>>, vector<1x1x8x8xbf16>,
    %c0_15 = arith.constant 0 : index
    %c0_16 = arith.constant 0 : index
    %c0_17 = arith.constant 0 : index
    %15 = vector.load %arg5[%c0_15, %c0_16, %c0_17] : memref<4x32x8xbf16, #tpu.memory_space<vmem>>, vector<1x32x8xbf16>
    %16 = vector.shape_cast %15 : vector<1x32x8xbf16> to vector<32x8xbf16>
    %cst_18 = arith.constant dense<0.000000e+00> : vector<8x8xf32>
    %17 = tpu.matmul %3, %16, %cst_18 {dimension_numbers = #tpu.dot_dimension_numbers<[1], [0], [0], [1], [0, 0, 1, 1], [], []>} : vector<8x32xbf16>, vector<32x8xbf16>, vector<8x8xf32> -> vector<8x8xf32>
    %c0_19 = arith.constant 0 : index
    %c0_20 = arith.constant 0 : index
    %c0_21 = arith.constant 0 : index
    %18 = vector.load %arg7[%c0_19, %c0_20, %c0_21] : memref<4x1x8xf32, #tpu.memory_space<vmem>>, vector<1x1x8xf32>
    %19 = vector.shape_cast %18 : vector<1x1x8xf32> to vector<1x8xf32>
    %20 = vector.broadcast %19 : vector<1x8xf32> to vector<8x8xf32>
    %21 = arith.addf %17, %20 : vector<8x8xf32>
    %22 = arith.truncf %21 : vector<8x8xf32> to vector<8x8xbf16>
    %c0_22 = arith.constant 0 : index
    %c0_23 = arith.constant 0 : index
    %c0_24 = arith.constant 0 : index
    %c0_25 = arith.constant 0 : index
    %23 = vector.load %arg9[%c0_22, %c0_23, %c0_24, %c0_25] : memref<1x4x8x8xbf16, #tpu.memory_space<vmem>>, vector<1x1x8x8xbf16>
    %24 = vector.shape_cast %23 : vector<1x1x8x8xbf16> to vector<8x8xbf16>
    %25 = vector.shape_cast %22 : vector<8x8xbf16> to vector<1x1x8x8xbf16>
    tpu.vector_store %arg9[%c0_22, %c0_23, %c0_24, %c0_25], %25 {strides = array<i32>} : memref<1x4x8x8xbf16, #tpu.memory_space<vmem>>, vector<1x1x8x8xbf16>,
    %c1 = arith.constant 1 : index
    %c0_26 = arith.constant 0 : index
    %c0_27 = arith.constant 0 : index
    %26 = vector.load %arg4[%c1, %c0_26, %c0_27] : memref<4x8x32xbf16, #tpu.memory_space<vmem>>, vector<1x8x32xbf16>
    %27 = vector.shape_cast %26 : vector<1x8x32xbf16> to vector<8x32xbf16>
    %cst_28 = arith.constant dense<0.000000e+00> : vector<8x8xf32>
    %28 = tpu.matmul %27, %1, %cst_28 {dimension_numbers = #tpu.dot_dimension_numbers<[1], [1], [0], [0], [0, 0, 1, 0], [], []>} : vector<8x32xbf16>, vector<8x32xbf16>, vector<8x8xf32> -> vector<8x8xf32>
    %c1_29 = arith.constant 1 : index
    %c0_30 = arith.constant 0 : index
    %c0_31 = arith.constant 0 : index
    %29 = vector.load %arg6[%c1_29, %c0_30, %c0_31] : memref<4x8x1xf32, #tpu.memory_space<vmem>>, vector<1x8x1xf32>
    %30 = vector.shape_cast %29 : vector<1x8x1xf32> to vector<8x1xf32>
    %31 = vector.broadcast %30 : vector<8x1xf32> to vector<8x8xf32>
    %32 = arith.addf %28, %31 : vector<8x8xf32>
    %33 = arith.truncf %32 : vector<8x8xf32> to vector<8x8xbf16>
    %c0_32 = arith.constant 0 : index
    %c1_33 = arith.constant 1 : index
    %c0_34 = arith.constant 0 : index
    %c0_35 = arith.constant 0 : index
    %34 = vector.load %arg8[%c0_32, %c1_33, %c0_34, %c0_35] : memref<1x4x8x8xbf16, #tpu.memory_space<vmem>>, vector<1x1x8x8xbf16>
    %35 = vector.shape_cast %34 : vector<1x1x8x8xbf16> to vector<8x8xbf16>
    %36 = vector.shape_cast %33 : vector<8x8xbf16> to vector<1x1x8x8xbf16>
    tpu.vector_store %arg8[%c0_32, %c1_33, %c0_34, %c0_35], %36 {strides = array<i32>} : memref<1x4x8x8xbf16, #tpu.memory_space<vmem>>, vector<1x1x8x8xbf16>,
    %c1_36 = arith.constant 1 : index
    %c0_37 = arith.constant 0 : index
    %c0_38 = arith.constant 0 : index
    %37 = vector.load %arg5[%c1_36, %c0_37, %c0_38] : memref<4x32x8xbf16, #tpu.memory_space<vmem>>, vector<1x32x8xbf16>
    %38 = vector.shape_cast %37 : vector<1x32x8xbf16> to vector<32x8xbf16>
    %cst_39 = arith.constant dense<0.000000e+00> : vector<8x8xf32>
    %39 = tpu.matmul %3, %38, %cst_39 {dimension_numbers = #tpu.dot_dimension_numbers<[1], [0], [0], [1], [0, 0, 1, 1], [], []>} : vector<8x32xbf16>, vector<32x8xbf16>, vector<8x8xf32> -> vector<8x8xf32>
    %c1_40 = arith.constant 1 : index
    %c0_41 = arith.constant 0 : index
    %c0_42 = arith.constant 0 : index
    %40 = vector.load %arg7[%c1_40, %c0_41, %c0_42] : memref<4x1x8xf32, #tpu.memory_space<vmem>>, vector<1x1x8xf32>
    %41 = vector.shape_cast %40 : vector<1x1x8xf32> to vector<1x8xf32>
    %42 = vector.broadcast %41 : vector<1x8xf32> to vector<8x8xf32>
    %43 = arith.addf %39, %42 : vector<8x8xf32>
    %44 = arith.truncf %43 : vector<8x8xf32> to vector<8x8xbf16>
    %c0_43 = arith.constant 0 : index
    %c1_44 = arith.constant 1 : index
    %c0_45 = arith.constant 0 : index
    %c0_46 = arith.constant 0 : index
    %45 = vector.load %arg9[%c0_43, %c1_44, %c0_45, %c0_46] : memref<1x4x8x8xbf16, #tpu.memory_space<vmem>>, vector<1x1x8x8xbf16>
    %46 = vector.shape_cast %45 : vector<1x1x8x8xbf16> to vector<8x8xbf16>
    %47 = vector.shape_cast %44 : vector<8x8xbf16> to vector<1x1x8x8xbf16>
    tpu.vector_store %arg9[%c0_43, %c1_44, %c0_45, %c0_46], %47 {strides = array<i32>} : memref<1x4x8x8xbf16, #tpu.memory_space<vmem>>, vector<1x1x8x8xbf16>,
    %c2 = arith.constant 2 : index
    %c0_47 = arith.constant 0 : index
    %c0_48 = arith.constant 0 : index
    %48 = vector.load %arg4[%c2, %c0_47, %c0_48] : memref<4x8x32xbf16, #tpu.memory_space<vmem>>, vector<1x8x32xbf16>
    %49 = vector.shape_cast %48 : vector<1x8x32xbf16> to vector<8x32xbf16>
    %cst_49 = arith.constant dense<0.000000e+00> : vector<8x8xf32>
    %50 = tpu.matmul %49, %1, %cst_49 {dimension_numbers = #tpu.dot_dimension_numbers<[1], [1], [0], [0], [0, 0, 1, 0], [], []>} : vector<8x32xbf16>, vector<8x32xbf16>, vector<8x8xf32> -> vector<8x8xf32>
    %c2_50 = arith.constant 2 : index
    %c0_51 = arith.constant 0 : index
    %c0_52 = arith.constant 0 : index
    %51 = vector.load %arg6[%c2_50, %c0_51, %c0_52] : memref<4x8x1xf32, #tpu.memory_space<vmem>>, vector<1x8x1xf32>
    %52 = vector.shape_cast %51 : vector<1x8x1xf32> to vector<8x1xf32>
    %53 = vector.broadcast %52 : vector<8x1xf32> to vector<8x8xf32>
    %54 = arith.addf %50, %53 : vector<8x8xf32>
    %55 = arith.truncf %54 : vector<8x8xf32> to vector<8x8xbf16>
    %c0_53 = arith.constant 0 : index
    %c2_54 = arith.constant 2 : index
    %c0_55 = arith.constant 0 : index
    %c0_56 = arith.constant 0 : index
    %56 = vector.load %arg8[%c0_53, %c2_54, %c0_55, %c0_56] : memref<1x4x8x8xbf16, #tpu.memory_space<vmem>>, vector<1x1x8x8xbf16>
    %57 = vector.shape_cast %56 : vector<1x1x8x8xbf16> to vector<8x8xbf16>
    %58 = vector.shape_cast %55 : vector<8x8xbf16> to vector<1x1x8x8xbf16>
    tpu.vector_store %arg8[%c0_53, %c2_54, %c0_55, %c0_56], %58 {strides = array<i32>} : memref<1x4x8x8xbf16, #tpu.memory_space<vmem>>, vector<1x1x8x8xbf16>,
    %c2_57 = arith.constant 2 : index
    %c0_58 = arith.constant 0 : index
    %c0_59 = arith.constant 0 : index
    %59 = vector.load %arg5[%c2_57, %c0_58, %c0_59] : memref<4x32x8xbf16, #tpu.memory_space<vmem>>, vector<1x32x8xbf16>
    %60 = vector.shape_cast %59 : vector<1x32x8xbf16> to vector<32x8xbf16>
    %cst_60 = arith.constant dense<0.000000e+00> : vector<8x8xf32>
    %61 = tpu.matmul %3, %60, %cst_60 {dimension_numbers = #tpu.dot_dimension_numbers<[1], [0], [0], [1], [0, 0, 1, 1], [], []>} : vector<8x32xbf16>, vector<32x8xbf16>, vector<8x8xf32> -> vector<8x8xf32>
    %c2_61 = arith.constant 2 : index
    %c0_62 = arith.constant 0 : index
    %c0_63 = arith.constant 0 : index
    %62 = vector.load %arg7[%c2_61, %c0_62, %c0_63] : memref<4x1x8xf32, #tpu.memory_space<vmem>>, vector<1x1x8xf32>
    %63 = vector.shape_cast %62 : vector<1x1x8xf32> to vector<1x8xf32>
    %64 = vector.broadcast %63 : vector<1x8xf32> to vector<8x8xf32>
    %65 = arith.addf %61, %64 : vector<8x8xf32>
    %66 = arith.truncf %65 : vector<8x8xf32> to vector<8x8xbf16>
    %c0_64 = arith.constant 0 : index
    %c2_65 = arith.constant 2 : index
    %c0_66 = arith.constant 0 : index
    %c0_67 = arith.constant 0 : index
    %67 = vector.load %arg9[%c0_64, %c2_65, %c0_66, %c0_67] : memref<1x4x8x8xbf16, #tpu.memory_space<vmem>>, vector<1x1x8x8xbf16>
    %68 = vector.shape_cast %67 : vector<1x1x8x8xbf16> to vector<8x8xbf16>
    %69 = vector.shape_cast %66 : vector<8x8xbf16> to vector<1x1x8x8xbf16>
    tpu.vector_store %arg9[%c0_64, %c2_65, %c0_66, %c0_67], %69 {strides = array<i32>} : memref<1x4x8x8xbf16, #tpu.memory_space<vmem>>, vector<1x1x8x8xbf16>,
    %c3 = arith.constant 3 : index
    %c0_68 = arith.constant 0 : index
    %c0_69 = arith.constant 0 : index
    %70 = vector.load %arg4[%c3, %c0_68, %c0_69] : memref<4x8x32xbf16, #tpu.memory_space<vmem>>, vector<1x8x32xbf16>
    %71 = vector.shape_cast %70 : vector<1x8x32xbf16> to vector<8x32xbf16>
    %cst_70 = arith.constant dense<0.000000e+00> : vector<8x8xf32>
    %72 = tpu.matmul %71, %1, %cst_70 {dimension_numbers = #tpu.dot_dimension_numbers<[1], [1], [0], [0], [0, 0, 1, 0], [], []>} : vector<8x32xbf16>, vector<8x32xbf16>, vector<8x8xf32> -> vector<8x8xf32>
    %c3_71 = arith.constant 3 : index
    %c0_72 = arith.constant 0 : index
    %c0_73 = arith.constant 0 : index
    %73 = vector.load %arg6[%c3_71, %c0_72, %c0_73] : memref<4x8x1xf32, #tpu.memory_space<vmem>>, vector<1x8x1xf32>
    %74 = vector.shape_cast %73 : vector<1x8x1xf32> to vector<8x1xf32>
    %75 = vector.broadcast %74 : vector<8x1xf32> to vector<8x8xf32>
    %76 = arith.addf %72, %75 : vector<8x8xf32>
    %77 = arith.truncf %76 : vector<8x8xf32> to vector<8x8xbf16>
    %c0_74 = arith.constant 0 : index
    %c3_75 = arith.constant 3 : index
    %c0_76 = arith.constant 0 : index
    %c0_77 = arith.constant 0 : index
    %78 = vector.load %arg8[%c0_74, %c3_75, %c0_76, %c0_77] : memref<1x4x8x8xbf16, #tpu.memory_space<vmem>>, vector<1x1x8x8xbf16>
    %79 = vector.shape_cast %78 : vector<1x1x8x8xbf16> to vector<8x8xbf16>
    %80 = vector.shape_cast %77 : vector<8x8xbf16> to vector<1x1x8x8xbf16>
    tpu.vector_store %arg8[%c0_74, %c3_75, %c0_76, %c0_77], %80 {strides = array<i32>} : memref<1x4x8x8xbf16, #tpu.memory_space<vmem>>, vector<1x1x8x8xbf16>,
    %c3_78 = arith.constant 3 : index
    %c0_79 = arith.constant 0 : index
    %c0_80 = arith.constant 0 : index
    %81 = vector.load %arg5[%c3_78, %c0_79, %c0_80] : memref<4x32x8xbf16, #tpu.memory_space<vmem>>, vector<1x32x8xbf16>
    %82 = vector.shape_cast %81 : vector<1x32x8xbf16> to vector<32x8xbf16>
    %cst_81 = arith.constant dense<0.000000e+00> : vector<8x8xf32>
    %83 = tpu.matmul %3, %82, %cst_81 {dimension_numbers = #tpu.dot_dimension_numbers<[1], [0], [0], [1], [0, 0, 1, 1], [], []>} : vector<8x32xbf16>, vector<32x8xbf16>, vector<8x8xf32> -> vector<8x8xf32>
    %c3_82 = arith.constant 3 : index
    %c0_83 = arith.constant 0 : index
    %c0_84 = arith.constant 0 : index
    %84 = vector.load %arg7[%c3_82, %c0_83, %c0_84] : memref<4x1x8xf32, #tpu.memory_space<vmem>>, vector<1x1x8xf32>
    %85 = vector.shape_cast %84 : vector<1x1x8xf32> to vector<1x8xf32>
    %86 = vector.broadcast %85 : vector<1x8xf32> to vector<8x8xf32>
    %87 = arith.addf %83, %86 : vector<8x8xf32>
    %88 = arith.truncf %87 : vector<8x8xf32> to vector<8x8xbf16>
    %c0_85 = arith.constant 0 : index
    %c3_86 = arith.constant 3 : index
    %c0_87 = arith.constant 0 : index
    %c0_88 = arith.constant 0 : index
    %89 = vector.load %arg9[%c0_85, %c3_86, %c0_87, %c0_88] : memref<1x4x8x8xbf16, #tpu.memory_space<vmem>>, vector<1x1x8x8xbf16>
    %90 = vector.shape_cast %89 : vector<1x1x8x8xbf16> to vector<8x8xbf16>
    %91 = vector.shape_cast %88 : vector<8x8xbf16> to vector<1x1x8x8xbf16>
    tpu.vector_store %arg9[%c0_85, %c3_86, %c0_87, %c0_88], %91 {strides = array<i32>} : memref<1x4x8x8xbf16, #tpu.memory_space<vmem>>, vector<1x1x8x8xbf16>,
    return
  }
  func.func @transform_0(%arg0: i32, %arg1: i32) -> (i32, i32, i32) {
    %c0_i32 = arith.constant 0 : i32
    %c0_i32_0 = arith.constant 0 : i32
    return %arg0, %arg1, %c0_i32 : i32, i32, i32
  }
  func.func @transform_1(%arg0: i32, %arg1: i32) -> (i32, i32, i32) {
    %c0_i32 = arith.constant 0 : i32
    %c0_i32_0 = arith.constant 0 : i32
    return %arg0, %arg1, %c0_i32 : i32, i32, i32
  }
  func.func @transform_2(%arg0: i32, %arg1: i32) -> (i32, i32, i32) {
    %c0_i32 = arith.constant 0 : i32
    %c0_i32_0 = arith.constant 0 : i32
    %c0_i32_1 = arith.constant 0 : i32
    %c0_i32_2 = arith.constant 0 : i32
    return %c0_i32, %c0_i32_0, %c0_i32_1 : i32, i32, i32
  }
  func.func @transform_3(%arg0: i32, %arg1: i32) -> (i32, i32, i32) {
    %c0_i32 = arith.constant 0 : i32
    %c0_i32_0 = arith.constant 0 : i32
    %c0_i32_1 = arith.constant 0 : i32
    %c0_i32_2 = arith.constant 0 : i32
    return %c0_i32, %c0_i32_0, %c0_i32_1 : i32, i32, i32
  }
  func.func @transform_4(%arg0: i32, %arg1: i32) -> (i32, i32, i32) {
    %c0_i32 = arith.constant 0 : i32
    %c0_i32_0 = arith.constant 0 : i32
    %c0_i32_1 = arith.constant 0 : i32
    %c0_i32_2 = arith.constant 0 : i32
    return %c0_i32, %c0_i32_0, %c0_i32_1 : i32, i32, i32
  }
  func.func @transform_5(%arg0: i32, %arg1: i32) -> (i32, i32, i32) {
    %c0_i32 = arith.constant 0 : i32
    %c0_i32_0 = arith.constant 0 : i32
    %c0_i32_1 = arith.constant 0 : i32
    %c0_i32_2 = arith.constant 0 : i32
    return %c0_i32, %c0_i32_0, %c0_i32_1 : i32, i32, i32
  }
  func.func @transform_6(%arg0: i32, %arg1: i32) -> (i32, i32, i32, i32) {
    %c0_i32 = arith.constant 0 : i32
    %c0_i32_0 = arith.constant 0 : i32
    %c0_i32_1 = arith.constant 0 : i32
    return %arg0, %c0_i32, %c0_i32_0, %arg1 : i32, i32, i32, i32
  }
  func.func @transform_7(%arg0: i32, %arg1: i32) -> (i32, i32, i32, i32) {
    %c0_i32 = arith.constant 0 : i32
    %c0_i32_0 = arith.constant 0 : i32
    %c0_i32_1 = arith.constant 0 : i32
    return %arg0, %c0_i32, %arg1, %c0_i32_0 : i32, i32, i32, i32
  }
}

module attributes {stable_mosaic.version = 11 : i64} {
  func.func @kv_proj_kernel(%arg0: i32, %arg1: i32, %arg2: memref<1x8x32xbf16, #tpu.memory_space<vmem>>, %arg3: memref<1x8x32xbf16, #tpu.memory_space<vmem>>, %arg4: memref<4x8x32xbf16, #tpu.memory_space<vmem>>, %arg5: memref<4x32x8xbf16, #tpu.memory_space<vmem>>, %arg6: memref<4x8x1xf32, #tpu.memory_space<vmem>>, %arg7: memref<4x1x8xf32, #tpu.memory_space<vmem>>, %arg8: memref<1x4x8x8xbf16, #tpu.memory_space<vmem>>, %arg9: memref<1x4x8x8xbf16, #tpu.memory_space<vmem>>) attributes {dimension_semantics = [#tpu.dimension_semantics<parallel>, #tpu.dimension_semantics<parallel>], iteration_bounds = array<i64: 2, 1>, scalar_prefetch = 0 : i64, scratch_operands = 0 : i64, tpu.core_type = #tpu.core_type<tc>, window_params = [{transform_indices = @transform_0, window_bounds = array<i64: 1, 8, 32>}, {transform_indices = @transform_1, window_bounds = array<i64: 1, 8, 32>}, {pipeline_mode = #tpu.pipeline_mode<synchronous>, transform_indices = @transform_2, window_bounds = array<i64: 4, 8, 32>}, {pipeline_mode = #tpu.pipeline_mode<synchronous>, transform_indices = @transform_3, window_bounds = array<i64: 4, 32, 8>}, {pipeline_mode = #tpu.pipeline_mode<synchronous>, transform_indices = @transform_4, window_bounds = array<i64: 4, 8, 1>}, {pipeline_mode = #tpu.pipeline_mode<synchronous>, transform_indices = @transform_5, window_bounds = array<i64: 4, 1, 8>}, {transform_indices = @transform_6, window_bounds = array<i64: 1, 4, 8, 8>}, {transform_indices = @transform_7, window_bounds = array<i64: 1, 4, 8, 8>}]} {
    %c0 = arith.constant 0 : index
    %c0_0 = arith.constant 0 : index
    %c0_1 = arith.constant 0 : index
    %0 = vector.load %arg2[%c0, %c0_0, %c0_1] : memref<1x8x32xbf16, #tpu.memory_space<vmem>>, vector<1x8x32xbf16>
    %1 = vector.shape_cast %0 : vector<1x8x32xbf16> to vector<8x32xbf16>
    %c0_2 = arith.constant 0 : index
    %c0_3 = arith.constant 0 : index
    %c0_4 = arith.constant 0 : index
    %2 = vector.load %arg3[%c0_2, %c0_3, %c0_4] : memref<1x8x32xbf16, #tpu.memory_space<vmem>>, vector<1x8x32xbf16>
    %3 = vector.shape_cast %2 : vector<1x8x32xbf16> to vector<8x32xbf16>
    %c0_5 = arith.constant 0 : index
    %c0_6 = arith.constant 0 : index
    %c0_7 = arith.constant 0 : index
    %4 = vector.load %arg4[%c0_5, %c0_6, %c0_7] : memref<4x8x32xbf16, #tpu.memory_space<vmem>>, vector<1x8x32xbf16>
    %5 = vector.shape_cast %4 : vector<1x8x32xbf16> to vector<8x32xbf16>
    %cst = arith.constant dense<0.000000e+00> : vector<8x8xf32>
    %6 = tpu.matmul %5, %1, %cst {dimension_numbers = #tpu.dot_dimension_numbers<[1], [1], [0], [0], [0, 0, 1, 0], [], []>} : vector<8x32xbf16>, vector<8x32xbf16>, vector<8x8xf32> -> vector<8x8xf32>
    %c0_8 = arith.constant 0 : index
    %c0_9 = arith.constant 0 : index
    %c0_10 = arith.constant 0 : index
    %7 = vector.load %arg6[%c0_8, %c0_9, %c0_10] : memref<4x8x1xf32, #tpu.memory_space<vmem>>, vector<1x8x1xf32>
    %8 = vector.shape_cast %7 : vector<1x8x1xf32> to vector<8x1xf32>
    %9 = vector.broadcast %8 : vector<8x1xf32> to vector<8x8xf32>
    %10 = arith.addf %6, %9 : vector<8x8xf32>
    %11 = arith.truncf %10 : vector<8x8xf32> to vector<8x8xbf16>
    %c0_11 = arith.constant 0 : index
    %c0_12 = arith.constant 0 : index
    %c0_13 = arith.constant 0 : index
    %c0_14 = arith.constant 0 : index
    %12 = vector.load %arg8[%c0_11, %c0_12, %c0_13, %c0_14] : memref<1x4x8x8xbf16, #tpu.memory_space<vmem>>, vector<1x1x8x8xbf16>
    %13 = vector.shape_cast %12 : vector<1x1x8x8xbf16> to vector<8x8xbf16>
    %14 = vector.shape_cast %11 : vector<8x8xbf16> to vector<1x1x8x8xbf16>
    tpu.vector_store %arg8[%c0_11, %c0_12, %c0_13, %c0_14], %14 {strides = array<i32>} : memref<1x4x8x8xbf16, #tpu.memory_space<vmem>>, vector<1x1x8x8xbf16>,
    %c0_15 = arith.constant 0 : index
    %c0_16 = arith.constant 0 : index
    %c0_17 = arith.constant 0 : index
    %15 = vector.load %arg5[%c0_15, %c0_16, %c0_17] : memref<4x32x8xbf16, #tpu.memory_space<vmem>>, vector<1x32x8xbf16>
    %16 = vector.shape_cast %15 : vector<1x32x8xbf16> to vector<32x8xbf16>
    %cst_18 = arith.constant dense<0.000000e+00> : vector<8x8xf32>
    %17 = tpu.matmul %3, %16, %cst_18 {dimension_numbers = #tpu.dot_dimension_numbers<[1], [0], [0], [1], [0, 0, 1, 1], [], []>} : vector<8x32xbf16>, vector<32x8xbf16>, vector<8x8xf32> -> vector<8x8xf32>
    %c0_19 = arith.constant 0 : index
    %c0_20 = arith.constant 0 : index
    %c0_21 = arith.constant 0 : index
    %18 = vector.load %arg7[%c0_19, %c0_20, %c0_21] : memref<4x1x8xf32, #tpu.memory_space<vmem>>, vector<1x1x8xf32>
    %19 = vector.shape_cast %18 : vector<1x1x8xf32> to vector<1x8xf32>
    %20 = vector.broadcast %19 : vector<1x8xf32> to vector<8x8xf32>
    %21 = arith.addf %17, %20 : vector<8x8xf32>
    %22 = arith.truncf %21 : vector<8x8xf32> to vector<8x8xbf16>
    %c0_22 = arith.constant 0 : index
    %c0_23 = arith.constant 0 : index
    %c0_24 = arith.constant 0 : index
    %c0_25 = arith.constant 0 : index
    %23 = vector.load %arg9[%c0_22, %c0_23, %c0_24, %c0_25] : memref<1x4x8x8xbf16, #tpu.memory_space<vmem>>, vector<1x1x8x8xbf16>
    %24 = vector.shape_cast %23 : vector<1x1x8x8xbf16> to vector<8x8xbf16>
    %25 = vector.shape_cast %22 : vector<8x8xbf16> to vector<1x1x8x8xbf16>
    tpu.vector_store %arg9[%c0_22, %c0_23, %c0_24, %c0_25], %25 {strides = array<i32>} : memref<1x4x8x8xbf16, #tpu.memory_space<vmem>>, vector<1x1x8x8xbf16>,
    %c1 = arith.constant 1 : index
    %c0_26 = arith.constant 0 : index
    %c0_27 = arith.constant 0 : index
    %26 = vector.load %arg4[%c1, %c0_26, %c0_27] : memref<4x8x32xbf16, #tpu.memory_space<vmem>>, vector<1x8x32xbf16>
    %27 = vector.shape_cast %26 : vector<1x8x32xbf16> to vector<8x32xbf16>
    %cst_28 = arith.constant dense<0.000000e+00> : vector<8x8xf32>
    %28 = tpu.matmul %27, %1, %cst_28 {dimension_numbers = #tpu.dot_dimension_numbers<[1], [1], [0], [0], [0, 0, 1, 0], [], []>} : vector<8x32xbf16>, vector<8x32xbf16>, vector<8x8xf32> -> vector<8x8xf32>
    %c1_29 = arith.constant 1 : index
    %c0_30 = arith.constant 0 : index
    %c0_31 = arith.constant 0 : index
    %29 = vector.load %arg6[%c1_29, %c0_30, %c0_31] : memref<4x8x1xf32, #tpu.memory_space<vmem>>, vector<1x8x1xf32>
    %30 = vector.shape_cast %29 : vector<1x8x1xf32> to vector<8x1xf32>
    %31 = vector.broadcast %30 : vector<8x1xf32> to vector<8x8xf32>
    %32 = arith.addf %28, %31 : vector<8x8xf32>
    %33 = arith.truncf %32 : vector<8x8xf32> to vector<8x8xbf16>
    %c0_32 = arith.constant 0 : index
    %c1_33 = arith.constant 1 : index
    %c0_34 = arith.constant 0 : index
    %c0_35 = arith.constant 0 : index
    %34 = vector.load %arg8[%c0_32, %c1_33, %c0_34, %c0_35] : memref<1x4x8x8xbf16, #tpu.memory_space<vmem>>, vector<1x1x8x8xbf16>
    %35 = vector.shape_cast %34 : vector<1x1x8x8xbf16> to vector<8x8xbf16>
    %36 = vector.shape_cast %33 : vector<8x8xbf16> to vector<1x1x8x8xbf16>
    tpu.vector_store %arg8[%c0_32, %c1_33, %c0_34, %c0_35], %36 {strides = array<i32>} : memref<1x4x8x8xbf16, #tpu.memory_space<vmem>>, vector<1x1x8x8xbf16>,
    %c1_36 = arith.constant 1 : index
    %c0_37 = arith.constant 0 : index
    %c0_38 = arith.constant 0 : index
    %37 = vector.load %arg5[%c1_36, %c0_37, %c0_38] : memref<4x32x8xbf16, #tpu.memory_space<vmem>>, vector<1x32x8xbf16>
    %38 = vector.shape_cast %37 : vector<1x32x8xbf16> to vector<32x8xbf16>
    %cst_39 = arith.constant dense<0.000000e+00> : vector<8x8xf32>
    %39 = tpu.matmul %3, %38, %cst_39 {dimension_numbers = #tpu.dot_dimension_numbers<[1], [0], [0], [1], [0, 0, 1, 1], [], []>} : vector<8x32xbf16>, vector<32x8xbf16>, vector<8x8xf32> -> vector<8x8xf32>
    %c1_40 = arith.constant 1 : index
    %c0_41 = arith.constant 0 : index
    %c0_42 = arith.constant 0 : index
    %40 = vector.load %arg7[%c1_40, %c0_41, %c0_42] : memref<4x1x8xf32, #tpu.memory_space<vmem>>, vector<1x1x8xf32>
    %41 = vector.shape_cast %40 : vector<1x1x8xf32> to vector<1x8xf32>
    %42 = vector.broadcast %41 : vector<1x8xf32> to vector<8x8xf32>
    %43 = arith.addf %39, %42 : vector<8x8xf32>
    %44 = arith.truncf %43 : vector<8x8xf32> to vector<8x8xbf16>
    %c0_43 = arith.constant 0 : index
    %c1_44 = arith.constant 1 : index
    %c0_45 = arith.constant 0 : index
    %c0_46 = arith.constant 0 : index
    %45 = vector.load %arg9[%c0_43, %c1_44, %c0_45, %c0_46] : memref<1x4x8x8xbf16, #tpu.memory_space<vmem>>, vector<1x1x8x8xbf16>
    %46 = vector.shape_cast %45 : vector<1x1x8x8xbf16> to vector<8x8xbf16>
    %47 = vector.shape_cast %44 : vector<8x8xbf16> to vector<1x1x8x8xbf16>
    tpu.vector_store %arg9[%c0_43, %c1_44, %c0_45, %c0_46], %47 {strides = array<i32>} : memref<1x4x8x8xbf16, #tpu.memory_space<vmem>>, vector<1x1x8x8xbf16>,
    %c2 = arith.constant 2 : index
    %c0_47 = arith.constant 0 : index
    %c0_48 = arith.constant 0 : index
    %48 = vector.load %arg4[%c2, %c0_47, %c0_48] : memref<4x8x32xbf16, #tpu.memory_space<vmem>>, vector<1x8x32xbf16>
    %49 = vector.shape_cast %48 : vector<1x8x32xbf16> to vector<8x32xbf16>
    %cst_49 = arith.constant dense<0.000000e+00> : vector<8x8xf32>
    %50 = tpu.matmul %49, %1, %cst_49 {dimension_numbers = #tpu.dot_dimension_numbers<[1], [1], [0], [0], [0, 0, 1, 0], [], []>} : vector<8x32xbf16>, vector<8x32xbf16>, vector<8x8xf32> -> vector<8x8xf32>
    %c2_50 = arith.constant 2 : index
    %c0_51 = arith.constant 0 : index
    %c0_52 = arith.constant 0 : index
    %51 = vector.load %arg6[%c2_50, %c0_51, %c0_52] : memref<4x8x1xf32, #tpu.memory_space<vmem>>, vector<1x8x1xf32>
    %52 = vector.shape_cast %51 : vector<1x8x1xf32> to vector<8x1xf32>
    %53 = vector.broadcast %52 : vector<8x1xf32> to vector<8x8xf32>
    %54 = arith.addf %50, %53 : vector<8x8xf32>
    %55 = arith.truncf %54 : vector<8x8xf32> to vector<8x8xbf16>
    %c0_53 = arith.constant 0 : index
    %c2_54 = arith.constant 2 : index
    %c0_55 = arith.constant 0 : index
    %c0_56 = arith.constant 0 : index
    %56 = vector.load %arg8[%c0_53, %c2_54, %c0_55, %c0_56] : memref<1x4x8x8xbf16, #tpu.memory_space<vmem>>, vector<1x1x8x8xbf16>
    %57 = vector.shape_cast %56 : vector<1x1x8x8xbf16> to vector<8x8xbf16>
    %58 = vector.shape_cast %55 : vector<8x8xbf16> to vector<1x1x8x8xbf16>
    tpu.vector_store %arg8[%c0_53, %c2_54, %c0_55, %c0_56], %58 {strides = array<i32>} : memref<1x4x8x8xbf16, #tpu.memory_space<vmem>>, vector<1x1x8x8xbf16>,
    %c2_57 = arith.constant 2 : index
    %c0_58 = arith.constant 0 : index
    %c0_59 = arith.constant 0 : index
    %59 = vector.load %arg5[%c2_57, %c0_58, %c0_59] : memref<4x32x8xbf16, #tpu.memory_space<vmem>>, vector<1x32x8xbf16>
    %60 = vector.shape_cast %59 : vector<1x32x8xbf16> to vector<32x8xbf16>
    %cst_60 = arith.constant dense<0.000000e+00> : vector<8x8xf32>
    %61 = tpu.matmul %3, %60, %cst_60 {dimension_numbers = #tpu.dot_dimension_numbers<[1], [0], [0], [1], [0, 0, 1, 1], [], []>} : vector<8x32xbf16>, vector<32x8xbf16>, vector<8x8xf32> -> vector<8x8xf32>
    %c2_61 = arith.constant 2 : index
    %c0_62 = arith.constant 0 : index
    %c0_63 = arith.constant 0 : index
    %62 = vector.load %arg7[%c2_61, %c0_62, %c0_63] : memref<4x1x8xf32, #tpu.memory_space<vmem>>, vector<1x1x8xf32>
    %63 = vector.shape_cast %62 : vector<1x1x8xf32> to vector<1x8xf32>
    %64 = vector.broadcast %63 : vector<1x8xf32> to vector<8x8xf32>
    %65 = arith.addf %61, %64 : vector<8x8xf32>
    %66 = arith.truncf %65 : vector<8x8xf32> to vector<8x8xbf16>
    %c0_64 = arith.constant 0 : index
    %c2_65 = arith.constant 2 : index
    %c0_66 = arith.constant 0 : index
    %c0_67 = arith.constant 0 : index
    %67 = vector.load %arg9[%c0_64, %c2_65, %c0_66, %c0_67] : memref<1x4x8x8xbf16, #tpu.memory_space<vmem>>, vector<1x1x8x8xbf16>
    %68 = vector.shape_cast %67 : vector<1x1x8x8xbf16> to vector<8x8xbf16>
    %69 = vector.shape_cast %66 : vector<8x8xbf16> to vector<1x1x8x8xbf16>
    tpu.vector_store %arg9[%c0_64, %c2_65, %c0_66, %c0_67], %69 {strides = array<i32>} : memref<1x4x8x8xbf16, #tpu.memory_space<vmem>>, vector<1x1x8x8xbf16>,
    %c3 = arith.constant 3 : index
    %c0_68 = arith.constant 0 : index
    %c0_69 = arith.constant 0 : index
    %70 = vector.load %arg4[%c3, %c0_68, %c0_69] : memref<4x8x32xbf16, #tpu.memory_space<vmem>>, vector<1x8x32xbf16>
    %71 = vector.shape_cast %70 : vector<1x8x32xbf16> to vector<8x32xbf16>
    %cst_70 = arith.constant dense<0.000000e+00> : vector<8x8xf32>
    %72 = tpu.matmul %71, %1, %cst_70 {dimension_numbers = #tpu.dot_dimension_numbers<[1], [1], [0], [0], [0, 0, 1, 0], [], []>} : vector<8x32xbf16>, vector<8x32xbf16>, vector<8x8xf32> -> vector<8x8xf32>
    %c3_71 = arith.constant 3 : index
    %c0_72 = arith.constant 0 : index
    %c0_73 = arith.constant 0 : index
    %73 = vector.load %arg6[%c3_71, %c0_72, %c0_73] : memref<4x8x1xf32, #tpu.memory_space<vmem>>, vector<1x8x1xf32>
    %74 = vector.shape_cast %73 : vector<1x8x1xf32> to vector<8x1xf32>
    %75 = vector.broadcast %74 : vector<8x1xf32> to vector<8x8xf32>
    %76 = arith.addf %72, %75 : vector<8x8xf32>
    %77 = arith.truncf %76 : vector<8x8xf32> to vector<8x8xbf16>
    %c0_74 = arith.constant 0 : index
    %c3_75 = arith.constant 3 : index
    %c0_76 = arith.constant 0 : index
    %c0_77 = arith.constant 0 : index
    %78 = vector.load %arg8[%c0_74, %c3_75, %c0_76, %c0_77] : memref<1x4x8x8xbf16, #tpu.memory_space<vmem>>, vector<1x1x8x8xbf16>
    %79 = vector.shape_cast %78 : vector<1x1x8x8xbf16> to vector<8x8xbf16>
    %80 = vector.shape_cast %77 : vector<8x8xbf16> to vector<1x1x8x8xbf16>
    tpu.vector_store %arg8[%c0_74, %c3_75, %c0_76, %c0_77], %80 {strides = array<i32>} : memref<1x4x8x8xbf16, #tpu.memory_space<vmem>>, vector<1x1x8x8xbf16>,
    %c3_78 = arith.constant 3 : index
    %c0_79 = arith.constant 0 : index
    %c0_80 = arith.constant 0 : index
    %81 = vector.load %arg5[%c3_78, %c0_79, %c0_80] : memref<4x32x8xbf16, #tpu.memory_space<vmem>>, vector<1x32x8xbf16>
    %82 = vector.shape_cast %81 : vector<1x32x8xbf16> to vector<32x8xbf16>
    %cst_81 = arith.constant dense<0.000000e+00> : vector<8x8xf32>
    %83 = tpu.matmul %3, %82, %cst_81 {dimension_numbers = #tpu.dot_dimension_numbers<[1], [0], [0], [1], [0, 0, 1, 1], [], []>} : vector<8x32xbf16>, vector<32x8xbf16>, vector<8x8xf32> -> vector<8x8xf32>
    %c3_82 = arith.constant 3 : index
    %c0_83 = arith.constant 0 : index
    %c0_84 = arith.constant 0 : index
    %84 = vector.load %arg7[%c3_82, %c0_83, %c0_84] : memref<4x1x8xf32, #tpu.memory_space<vmem>>, vector<1x1x8xf32>
    %85 = vector.shape_cast %84 : vector<1x1x8xf32> to vector<1x8xf32>
    %86 = vector.broadcast %85 : vector<1x8xf32> to vector<8x8xf32>
    %87 = arith.addf %83, %86 : vector<8x8xf32>
    %88 = arith.truncf %87 : vector<8x8xf32> to vector<8x8xbf16>
    %c0_85 = arith.constant 0 : index
    %c3_86 = arith.constant 3 : index
    %c0_87 = arith.constant 0 : index
    %c0_88 = arith.constant 0 : index
    %89 = vector.load %arg9[%c0_85, %c3_86, %c0_87, %c0_88] : memref<1x4x8x8xbf16, #tpu.memory_space<vmem>>, vector<1x1x8x8xbf16>
    %90 = vector.shape_cast %89 : vector<1x1x8x8xbf16> to vector<8x8xbf16>
    %91 = vector.shape_cast %88 : vector<8x8xbf16> to vector<1x1x8x8xbf16>
    tpu.vector_store %arg9[%c0_85, %c3_86, %c0_87, %c0_88], %91 {strides = array<i32>} : memref<1x4x8x8xbf16, #tpu.memory_space<vmem>>, vector<1x1x8x8xbf16>,
    return
  }
  func.func @transform_0(%arg0: i32, %arg1: i32) -> (i32, i32, i32) {
    %c0_i32 = arith.constant 0 : i32
    %c0_i32_0 = arith.constant 0 : i32
    return %arg0, %arg1, %c0_i32 : i32, i32, i32
  }
  func.func @transform_1(%arg0: i32, %arg1: i32) -> (i32, i32, i32) {
    %c0_i32 = arith.constant 0 : i32
    %c0_i32_0 = arith.constant 0 : i32
    return %arg0, %arg1, %c0_i32 : i32, i32, i32
  }
  func.func @transform_2(%arg0: i32, %arg1: i32) -> (i32, i32, i32) {
    %c0_i32 = arith.constant 0 : i32
    %c0_i32_0 = arith.constant 0 : i32
    %c0_i32_1 = arith.constant 0 : i32
    %c0_i32_2 = arith.constant 0 : i32
    return %c0_i32, %c0_i32_0, %c0_i32_1 : i32, i32, i32
  }
  func.func @transform_3(%arg0: i32, %arg1: i32) -> (i32, i32, i32) {
    %c0_i32 = arith.constant 0 : i32
    %c0_i32_0 = arith.constant 0 : i32
    %c0_i32_1 = arith.constant 0 : i32
    %c0_i32_2 = arith.constant 0 : i32
    return %c0_i32, %c0_i32_0, %c0_i32_1 : i32, i32, i32
  }
  func.func @transform_4(%arg0: i32, %arg1: i32) -> (i32, i32, i32) {
    %c0_i32 = arith.constant 0 : i32
    %c0_i32_0 = arith.constant 0 : i32
    %c0_i32_1 = arith.constant 0 : i32
    %c0_i32_2 = arith.constant 0 : i32
    return %c0_i32, %c0_i32_0, %c0_i32_1 : i32, i32, i32
  }
  func.func @transform_5(%arg0: i32, %arg1: i32) -> (i32, i32, i32) {
    %c0_i32 = arith.constant 0 : i32
    %c0_i32_0 = arith.constant 0 : i32
    %c0_i32_1 = arith.constant 0 : i32
    %c0_i32_2 = arith.constant 0 : i32
    return %c0_i32, %c0_i32_0, %c0_i32_1 : i32, i32, i32
  }
  func.func @transform_6(%arg0: i32, %arg1: i32) -> (i32, i32, i32, i32) {
    %c0_i32 = arith.constant 0 : i32
    %c0_i32_0 = arith.constant 0 : i32
    %c0_i32_1 = arith.constant 0 : i32
    return %arg0, %c0_i32, %c0_i32_0, %arg1 : i32, i32, i32, i32
  }
  func.func @transform_7(%arg0: i32, %arg1: i32) -> (i32, i32, i32, i32) {
    %c0_i32 = arith.constant 0 : i32
    %c0_i32_0 = arith.constant 0 : i32
    %c0_i32_1 = arith.constant 0 : i32
    return %arg0, %c0_i32, %arg1, %c0_i32_0 : i32, i32, i32, i32
  }
}

</mosaic_0001>

<llo_original>
// kernel: tpu_custom_call.1
$region0: #{tpu_custom_call.1}
  #allocation0 [shape = 'u32[]', space=smem, size = 0x4, offset = 0x4, fixed_abs, tag = 'smem constant byte address 0x4 - core index']
  #allocation1 [shape = 'u32[72,128]{1,0:T(1,128)}', space=vmem, size = 0x9000, scoped, tag = 'internal scratch']
  %s0 = inlined_call_operand.vmem [shape: bf16[2,8,32], index: 0, kind: input, shape index: {}]
  %s1 = inlined_call_operand.vmem [shape: bf16[2,8,32], index: 1, kind: input, shape index: {}]
  %s2 = inlined_call_operand.vmem [shape: bf16[4,8,32], index: 2, kind: input, shape index: {}]
  %s3 = inlined_call_operand.vmem [shape: bf16[4,32,8], index: 3, kind: input, shape index: {}]
  %s4 = inlined_call_operand.vmem [shape: f32[4,8,1], index: 4, kind: input, shape index: {}]
  %s5 = inlined_call_operand.vmem [shape: f32[4,1,8], index: 5, kind: input, shape index: {}]
  %s6 = inlined_call_operand.hbm [shape: bf16[2,4,8,8], index: 6, kind: output, shape index: {0}]
  %s7 = inlined_call_operand.hbm [shape: bf16[2,4,8,8], index: 7, kind: output, shape index: {1}]
  %8 = xla_tuple %s6, %s7
  %s9 = sld [smem:[#allocation0]]
  $region65: #{tpu_custom_call.1} parent=0
    _
  %s11 = ssub.s32 1, %s9
  %s12 = scalar_select 0, %s11, %s9
  $region1: #{tpu_custom_call.1} parent=0
    #allocation2 [shape = 'u8[16384]{0}', space=vmem, size = 0x4000, scoped, tag = 'output window, operand 0']
    #allocation3 [shape = 's32[2]{0}', space=sflag, size = 0x8, scoped, tag = 'scoped memory for tpu_custom_call.1']
    #allocation4 [shape = 'u8[16384]{0}', space=vmem, size = 0x4000, scoped, tag = 'output window, operand 1']
    #allocation5 [shape = 's32[2]{0}', space=sflag, size = 0x8, scoped, tag = 'scoped memory for tpu_custom_call.1']
    %13 = vsyncpa [#allocation3], 0
    %s14 = scalar_lea.sflag [#allocation3], 1
    %15 = vsyncpa %s14, 0
    %16 = vsyncpa [#allocation5], 0
    %s17 = scalar_lea.sflag [#allocation5], 1
    %18 = vsyncpa %s17, 0
    loop: start=0, step=1, limit=4
    $region2: #{tpu_custom_call.1} parent=1 // loop_pre_header
      _
    $region3: #{tpu_custom_call.1} parent=1 // loop_header
      %s20 = sphi 0, %s24
      %p21 = scmp.ge.s32.totalorder %s20, 4
      %s27 = sphi 0, %s39
      %s28 = sphi 0, %s35
      %s29 = sphi 0, %s27
      %s30 = sphi 0, %s28
      %s31 = sphi 0, %s29
      %s32 = sphi 0, %s30
      %s44 = sphi 0, %s46
      %s47 = sphi 0, %s44
      %s48 = sphi 0, %s47
      %s64 = sphi 0, %s48
      %s72 = sphi 0, %s74
      %s75 = sphi 0, %s72
      %s76 = sphi 0, %s75
      %s92 = sphi 0, %s76
      %s96 = sphi 0, %s96
      %s98 = sphi 0, %s96
      %s99 = sphi 0, %s98
      %s113 = sphi 0, %s99
      %s117 = sphi 0, %s117
      %s119 = sphi 0, %s117
      %s120 = sphi 0, %s119
      %s134 = sphi 0, %s120
      %s138 = sphi 0, %s138
      %s140 = sphi 0, %s138
      %s141 = sphi 0, %s140
      %s155 = sphi 0, %s141
      %s159 = sphi 0, %s159
      %s161 = sphi 0, %s159
      %s162 = sphi 0, %s161
      %s176 = sphi 0, %s162
      %s184 = sphi 0, %s186
      %s187 = sphi 0, %s184
      %s188 = sphi 0, %s187
      %s204 = sphi 0, %s188
      %s212 = sphi 0, %s214
      %s215 = sphi 0, %s212
      %s216 = sphi 0, %s215
      %s232 = sphi 0, %s216
    $region4: #{tpu_custom_call.1} parent=1 // loop_header_branch
      %23 = sbr.rel (%p21) target = $region8
    $region5: #{tpu_custom_call.1} parent=1 // loop_body
      %s25 = ssub.s32 %s20, 1
      %s26 = ssub.s32 %s20, 2
      %s33 = sadd.s32 1, %s28
      %p34 = scmp.ge.s32.totalorder %s33, 1
      %s35 = scalar_select %p34, 0, %s33
      %s36 = sadd.s32 1, %s27
      %s37 = scalar_select %p34, %s36, %s27
      %p38 = scmp.ge.s32.totalorder %s37, 2
      %s39 = scalar_select %p38, 0, %s37
      %s40 = ssub.s32 %s27, %s39
      %s41 = ssub.s32 %s28, %s35
      %s42 = sor.u32 %s40, %s41
      %p43 = scmp.eq.s32.totalorder %s42, 0
      %s45 = sadd.s32 %s44, 1
      %s46 = scalar_select %p43, %s44, %s45
      %p49 = pneg %p43
      %p50 = scmp.eq.s32.totalorder %s20, 1
      %p51 = por %p49, %p50
      %p52 = scmp.ne.s32.totalorder %s44, %s47
      %p53 = scmp.eq.s32.totalorder %s20, 0
      %p54 = por %p52, %p53
      %p55 = scmp.ne.s32.totalorder %s44, %s47
      %p56 = scmp.eq.s32.totalorder %s25, 1
      %p57 = por %p55, %p56
      %p58 = scmp.ne.s32.totalorder %s47, %s48
      %p59 = scmp.eq.s32.totalorder %s25, 0
      %p60 = por %p58, %p59
      %p61 = scmp.ne.s32.totalorder %s47, %s48
      %p62 = scmp.eq.s32.totalorder %s26, 1
      %p63 = por %p61, %p62
      %p65 = scmp.ne.s32.totalorder %s48, %s64
      %p66 = scmp.eq.s32.totalorder %s26, 0
      %p67 = por %p65, %p66
      %s68 = ssub.s32 %s27, %s39
      %s69 = ssub.s32 %s28, %s35
      %s70 = sor.u32 %s68, %s69
      %p71 = scmp.eq.s32.totalorder %s70, 0
      %s73 = sadd.s32 %s72, 1
      %s74 = scalar_select %p71, %s72, %s73
      %p77 = pneg %p71
      %p78 = scmp.eq.s32.totalorder %s20, 1
      %p79 = por %p77, %p78
      %p80 = scmp.ne.s32.totalorder %s72, %s75
      %p81 = scmp.eq.s32.totalorder %s20, 0
      %p82 = por %p80, %p81
      %p83 = scmp.ne.s32.totalorder %s72, %s75
      %p84 = scmp.eq.s32.totalorder %s25, 1
      %p85 = por %p83, %p84
      %p86 = scmp.ne.s32.totalorder %s75, %s76
      %p87 = scmp.eq.s32.totalorder %s25, 0
      %p88 = por %p86, %p87
      %p89 = scmp.ne.s32.totalorder %s75, %s76
      %p90 = scmp.eq.s32.totalorder %s26, 1
      %p91 = por %p89, %p90
      %p93 = scmp.ne.s32.totalorder %s76, %s92
      %p94 = scmp.eq.s32.totalorder %s26, 0
      %p95 = por %p93, %p94
      %s97 = sadd.s32 %s96, 1
      %p100 = scmp.eq.s32.totalorder %s20, 1
      %p101 = scmp.ne.s32.totalorder %s96, %s98
      %p102 = scmp.eq.s32.totalorder %s20, 0
      %p103 = por %p101, %p102
      %p104 = scmp.ne.s32.totalorder %s96, %s98
      %p105 = scmp.eq.s32.totalorder %s25, 1
      %p106 = por %p104, %p105
      %p107 = scmp.ne.s32.totalorder %s98, %s99
      %p108 = scmp.eq.s32.totalorder %s25, 0
      %p109 = por %p107, %p108
      %p110 = scmp.ne.s32.totalorder %s98, %s99
      %p111 = scmp.eq.s32.totalorder %s26, 1
      %p112 = por %p110, %p111
      %p114 = scmp.ne.s32.totalorder %s99, %s113
      %p115 = scmp.eq.s32.totalorder %s26, 0
      %p116 = por %p114, %p115
      %s118 = sadd.s32 %s117, 1
      %p121 = scmp.eq.s32.totalorder %s20, 1
      %p122 = scmp.ne.s32.totalorder %s117, %s119
      %p123 = scmp.eq.s32.totalorder %s20, 0
      %p124 = por %p122, %p123
      %p125 = scmp.ne.s32.totalorder %s117, %s119
      %p126 = scmp.eq.s32.totalorder %s25, 1
      %p127 = por %p125, %p126
      %p128 = scmp.ne.s32.totalorder %s119, %s120
      %p129 = scmp.eq.s32.totalorder %s25, 0
      %p130 = por %p128, %p129
      %p131 = scmp.ne.s32.totalorder %s119, %s120
      %p132 = scmp.eq.s32.totalorder %s26, 1
      %p133 = por %p131, %p132
      %p135 = scmp.ne.s32.totalorder %s120, %s134
      %p136 = scmp.eq.s32.totalorder %s26, 0
      %p137 = por %p135, %p136
      %s139 = sadd.s32 %s138, 1
      %p142 = scmp.eq.s32.totalorder %s20, 1
      %p143 = scmp.ne.s32.totalorder %s138, %s140
      %p144 = scmp.eq.s32.totalorder %s20, 0
      %p145 = por %p143, %p144
      %p146 = scmp.ne.s32.totalorder %s138, %s140
      %p147 = scmp.eq.s32.totalorder %s25, 1
      %p148 = por %p146, %p147
      %p149 = scmp.ne.s32.totalorder %s140, %s141
      %p150 = scmp.eq.s32.totalorder %s25, 0
      %p151 = por %p149, %p150
      %p152 = scmp.ne.s32.totalorder %s140, %s141
      %p153 = scmp.eq.s32.totalorder %s26, 1
      %p154 = por %p152, %p153
      %p156 = scmp.ne.s32.totalorder %s141, %s155
      %p157 = scmp.eq.s32.totalorder %s26, 0
      %p158 = por %p156, %p157
      %s160 = sadd.s32 %s159, 1
      %p163 = scmp.eq.s32.totalorder %s20, 1
      %p164 = scmp.ne.s32.totalorder %s159, %s161
      %p165 = scmp.eq.s32.totalorder %s20, 0
      %p166 = por %p164, %p165
      %p167 = scmp.ne.s32.totalorder %s159, %s161
      %p168 = scmp.eq.s32.totalorder %s25, 1
      %p169 = por %p167, %p168
      %p170 = scmp.ne.s32.totalorder %s161, %s162
      %p171 = scmp.eq.s32.totalorder %s25, 0
      %p172 = por %p170, %p171
      %p173 = scmp.ne.s32.totalorder %s161, %s162
      %p174 = scmp.eq.s32.totalorder %s26, 1
      %p175 = por %p173, %p174
      %p177 = scmp.ne.s32.totalorder %s162, %s176
      %p178 = scmp.eq.s32.totalorder %s26, 0
      %p179 = por %p177, %p178
      %s180 = ssub.s32 %s27, %s39
      %s181 = ssub.s32 %s28, %s35
      %s182 = sor.u32 %s180, %s181
      %p183 = scmp.eq.s32.totalorder %s182, 0
      %s185 = sadd.s32 %s184, 1
      %s186 = scalar_select %p183, %s184, %s185
      %p189 = pneg %p183
      %p190 = scmp.eq.s32.totalorder %s20, 1
      %p191 = por %p189, %p190
      %p192 = scmp.ne.s32.totalorder %s184, %s187
      %p193 = scmp.eq.s32.totalorder %s20, 0
      %p194 = por %p192, %p193
      %p195 = scmp.ne.s32.totalorder %s184, %s187
      %p196 = scmp.eq.s32.totalorder %s25, 1
      %p197 = por %p195, %p196
      %p198 = scmp.ne.s32.totalorder %s187, %s188
      %p199 = scmp.eq.s32.totalorder %s25, 0
      %p200 = por %p198, %p199
      %p201 = scmp.ne.s32.totalorder %s187, %s188
      %p202 = scmp.eq.s32.totalorder %s26, 1
      %p203 = por %p201, %p202
      %p205 = scmp.ne.s32.totalorder %s188, %s204
      %p206 = scmp.eq.s32.totalorder %s26, 0
      %p207 = por %p205, %p206
      %s208 = ssub.s32 %s27, %s39
      %s209 = ssub.s32 %s28, %s35
      %s210 = sor.u32 %s208, %s209
      %p211 = scmp.eq.s32.totalorder %s210, 0
      %s213 = sadd.s32 %s212, 1
      %s214 = scalar_select %p211, %s212, %s213
      %p217 = pneg %p211
      %p218 = scmp.eq.s32.totalorder %s20, 1
      %p219 = por %p217, %p218
      %p220 = scmp.ne.s32.totalorder %s212, %s215
      %p221 = scmp.eq.s32.totalorder %s20, 0
      %p222 = por %p220, %p221
      %p223 = scmp.ne.s32.totalorder %s212, %s215
      %p224 = scmp.eq.s32.totalorder %s25, 1
      %p225 = por %p223, %p224
      %p226 = scmp.ne.s32.totalorder %s215, %s216
      %p227 = scmp.eq.s32.totalorder %s25, 0
      %p228 = por %p226, %p227
      %p229 = scmp.ne.s32.totalorder %s215, %s216
      %p230 = scmp.eq.s32.totalorder %s26, 1
      %p231 = por %p229, %p230
      %p233 = scmp.ne.s32.totalorder %s216, %s232
      %p234 = scmp.eq.s32.totalorder %s26, 0
      %p235 = por %p233, %p234
      %p236 = scmp.le.s32.totalorder 1, %s20
      %p237 = scmp.lt.s32.totalorder %s20, 3
      %p238 = pnand %p236, %p237
      %p239 = pneg %p238
      // Predicated region
      $region9: #{tpu_custom_call.1} parent=5 // pred_check
        _
      $region10: #{tpu_custom_call.1} parent=5 // pred_check_branch
        %241 = sbr.rel (%p238) target = $region12
      $region11: #{tpu_custom_call.1} parent=5 // pred_region
        %s242 = ssub.s32 %s20, 1
        // Predicated region
        $region13: #{tpu_custom_call.1} parent=11 // pred_check
          %p243 = pneg %p109
        $region14: #{tpu_custom_call.1} parent=11 // pred_check_branch
          %245 = sbr.rel (%p243) target = $region16
        $region15: #{tpu_custom_call.1} parent=11 // pred_region
          _
        $region16: #{tpu_custom_call.1} parent=11 // pred_fallthru
          _
        // Predicated region
        $region17: #{tpu_custom_call.1} parent=11 // pred_check
          %p246 = pneg %p130
        $region18: #{tpu_custom_call.1} parent=11 // pred_check_branch
          %248 = sbr.rel (%p246) target = $region20
        $region19: #{tpu_custom_call.1} parent=11 // pred_region
          _
        $region20: #{tpu_custom_call.1} parent=11 // pred_fallthru
          _
        // Predicated region
        $region21: #{tpu_custom_call.1} parent=11 // pred_check
          %p249 = pneg %p151
        $region22: #{tpu_custom_call.1} parent=11 // pred_check_branch
          %251 = sbr.rel (%p249) target = $region24
        $region23: #{tpu_custom_call.1} parent=11 // pred_region
          _
        $region24: #{tpu_custom_call.1} parent=11 // pred_fallthru
          _
        // Predicated region
        $region25: #{tpu_custom_call.1} parent=11 // pred_check
          %p252 = pneg %p172
        $region26: #{tpu_custom_call.1} parent=11 // pred_check_branch
          %254 = sbr.rel (%p252) target = $region28
        $region27: #{tpu_custom_call.1} parent=11 // pred_region
          _
        $region28: #{tpu_custom_call.1} parent=11 // pred_fallthru
          _
      $region12: #{tpu_custom_call.1} parent=5 // pred_fallthru
        _
      %p255 = scmp.lt.s32.totalorder %s20, 2
      // Predicated region
      $region29: #{tpu_custom_call.1} parent=5 // pred_check
        %p256 = pneg %p255
      $region30: #{tpu_custom_call.1} parent=5 // pred_check_branch
        %258 = sbr.rel (%p256) target = $region32
      $region31: #{tpu_custom_call.1} parent=5 // pred_region
        // Predicated region
        $region33: #{tpu_custom_call.1} parent=31 // pred_check
          %p259 = pneg %p54
        $region34: #{tpu_custom_call.1} parent=31 // pred_check_branch
          %261 = sbr.rel (%p259) target = $region36
        $region35: #{tpu_custom_call.1} parent=31 // pred_region
          %p262 = scmp.lt.s32.totalorder %s27, 1
          %s263 = scalar_select %p262, %s27, 1
          %p264 = scmp.lt.s32.totalorder %s28, 0
          %s265 = scalar_select %p264, %s28, 0
          %s266 = sadd.s32 %s265, %s263
          %s267 = smul.addr %s266, 4
          %s268 = scalar_lea.vmem %s0, %s267
        $region36: #{tpu_custom_call.1} parent=31 // pred_fallthru
          _
        // Predicated region
        $region37: #{tpu_custom_call.1} parent=31 // pred_check
          %p269 = pneg %p82
        $region38: #{tpu_custom_call.1} parent=31 // pred_check_branch
          %271 = sbr.rel (%p269) target = $region40
        $region39: #{tpu_custom_call.1} parent=31 // pred_region
          %p272 = scmp.lt.s32.totalorder %s27, 1
          %s273 = scalar_select %p272, %s27, 1
          %p274 = scmp.lt.s32.totalorder %s28, 0
          %s275 = scalar_select %p274, %s28, 0
          %s276 = sadd.s32 %s275, %s273
          %s277 = smul.addr %s276, 4
          %s278 = scalar_lea.vmem %s1, %s277
        $region40: #{tpu_custom_call.1} parent=31 // pred_fallthru
          _
      $region32: #{tpu_custom_call.1} parent=5 // pred_fallthru
        _
      %p279 = scmp.le.s32.totalorder 1, %s20
      %p280 = scmp.lt.s32.totalorder %s20, 3
      %p281 = pnand %p279, %p280
      %p282 = pneg %p281
      // Predicated region
      $region41: #{tpu_custom_call.1} parent=5 // pred_check
        _
      $region42: #{tpu_custom_call.1} parent=5 // pred_check_branch
        %284 = sbr.rel (%p281) target = $region44
      $region43: #{tpu_custom_call.1} parent=5 // pred_region
        %s285 = ssub.s32 %s20, 1
        %p286 = scmp.lt.s32.totalorder %s29, 1
        %s287 = scalar_select %p286, %s29, 1
        %p288 = scmp.lt.s32.totalorder %s30, 0
        %s289 = scalar_select %p288, %s30, 0
        %s290 = sadd.s32 %s289, %s287
        %s291 = smul.addr %s290, 4
        %s292 = scalar_lea.vmem %s0, %s291
        %p293 = pneg %p60
        %p294 = pneg %p57
        %p295 = scmp.lt.s32.totalorder %s29, 1
        %s296 = scalar_select %p295, %s29, 1
        %p297 = scmp.lt.s32.totalorder %s30, 0
        %s298 = scalar_select %p297, %s30, 0
        %s299 = sadd.s32 %s298, %s296
        %s300 = smul.addr %s299, 4
        %s301 = scalar_lea.vmem %s1, %s300
        %p302 = pneg %p88
        %p303 = pneg %p85
        %p304 = pneg %p109
        %p305 = pneg %p106
        %p306 = pneg %p130
        %p307 = pneg %p127
        %p308 = pneg %p151
        %p309 = pneg %p148
        %p310 = pneg %p172
        %p311 = pneg %p169
        %p312 = pneg %p200
        %p313 = pneg %p197
        %s314 = sand.u32 %s187, 1
        %s315 = scalar_lea.sflag [#allocation3], %s314
        %s316 = sand.u32 %s187, 1
        %s317 = smul.addr %s316, 16
        %s318 = scalar_lea.vmem [#allocation2], %s317
        %p319 = pneg %p228
        %p320 = pneg %p225
        %s321 = sand.u32 %s215, 1
        %s322 = scalar_lea.sflag [#allocation5], %s321
        %s323 = sand.u32 %s215, 1
        %s324 = smul.addr %s323, 16
        %s325 = scalar_lea.vmem [#allocation4], %s324
        %p326 = scmp.lt.s32.totalorder %s29, 1
        %s327 = scalar_select %p326, %s29, 1
        %p328 = scmp.lt.s32.totalorder %s30, 0
        %s329 = scalar_select %p328, %s30, 0
        %s330 = sadd.s32 %s329, %s327
        %s331 = smul.addr %s330, 4
        %s332 = scalar_lea.vmem %s0, %s331
        %p333 = scmp.lt.s32.totalorder %s29, 1
        %s334 = scalar_select %p333, %s29, 1
        %p335 = scmp.lt.s32.totalorder %s30, 0
        %s336 = scalar_select %p335, %s30, 0
        %s337 = sadd.s32 %s336, %s334
        %s338 = smul.addr %s337, 4
        %s339 = scalar_lea.vmem %s1, %s338
        %v341 = vld [vmem:[%s332] sm:$0xf]
        %v342 = vld [vmem:[%s339] sm:$0xf]
        %v343 = vld [vmem:[%s2] sm:$0xf]
        %v344 = vld [vmem:[%s4] sm:$0xff]
        %346 = vset.pattern.permute.xlu0 0
        %347 = vperm.xlu0 %346, %v344
        %v348 = vpop.permute.xlu0 %347
        %vm350 = vcmask 261120
        %v352 = vsel %vm350, %v343, 0
        %v355 = vsel %vm350, %v341, 0
        %357 = vmatpush.bf16.xpose.msra.mxu0 0
        %358 = vmatpush.bf16.xpose.msra.mxu0 0
        %359 = vmatpush.bf16.xpose.msra.mxu0 0
        %360 = vmatpush.bf16.xpose.msra.mxu0 0
        %361 = vmatpush.bf16.xpose.msra.mxu0 0
        %362 = vmatpush.bf16.xpose.msra.mxu0 0
        %363 = vmatpush.bf16.xpose.msra.mxu0 0
        %364 = vmatpush.bf16.xpose.msra.mxu0 %v355
        %365 = vmatmul.bf16.gmra.mxu0 %v352
        %v366 = vpop.f32.mrf.mxu0
        %v367 = vadd.f32 %v348, %v366
        %v368 = vpop.f32.mrf.mxu0
        %369 = vdwg.mxu0
        %v370 = vpack.c.bf16 %v367, %v367
        %vm371 = vcmask 60416
        %372 = vst.msk [vmem:[%s318] sm:$0xf] %vm371, %v370
        %v373 = vld [vmem:[%s3] sm:$0xf]
        %v374 = vld [vmem:[%s3 + $0x4] sm:$0xf]
        %v375 = vld [vmem:[%s3 + $0x8] sm:$0xf]
        %v376 = vld [vmem:[%s3 + $0xc] sm:$0xf]
        %v377 = vld [vmem:[%s5] sm:$0x1]
        %v379 = vperm.slane %v377, 0
        %v385 = vunpack.c.l.b16 %v373
        %v386 = vunpack.c.l.b16 %v374
        %v387 = vunpack.c.l.b16 %v375
        %v388 = vunpack.c.l.b16 %v376
        %v389 = vpack.c.b16 %v386, %v385
        %v390 = vpack.c.b16 %v388, %v387
        %v394 = vsel %vm350, %v342, 0
        %396 = vmatpush.bf16.msra.mxu0 0
        %397 = vmatpush.bf16.msra.mxu0 0
        %398 = vmatpush.bf16.msra.mxu0 0
        %399 = vmatpush.bf16.msra.mxu0 0
        %400 = vmatpush.bf16.msra.mxu0 0
        %401 = vmatpush.bf16.msra.mxu0 0
        %402 = vmatpush.bf16.msra.mxu0 %v390
        %403 = vmatpush.bf16.msra.mxu0 %v389
        %404 = vmatmul.bf16.gmra.mxu0 %v394
        %v405 = vpop.f32.mrf.mxu0
        %v406 = vadd.f32 %v379, %v405
        %v407 = vpop.f32.mrf.mxu0
        %408 = vdwg.mxu0
        %v409 = vpack.c.bf16 %v406, %v406
        %410 = vst.msk [vmem:[%s325] sm:$0xf] %vm371, %v409
        %s411 = scalar_lea.vmem %s2, 4
        %v412 = vld [vmem:[%s411] sm:$0xf]
        %s413 = scalar_lea.vmem %s4, 8
        %v414 = vld [vmem:[%s413] sm:$0xff]
        %416 = vset.pattern.permute.xlu0 0
        %417 = vperm.xlu0 %416, %v414
        %v418 = vpop.permute.xlu0 %417
        %v421 = vsel %vm350, %v412, 0
        %423 = vmatpush.bf16.xpose.msra.mxu0 0
        %424 = vmatpush.bf16.xpose.msra.mxu0 0
        %425 = vmatpush.bf16.xpose.msra.mxu0 0
        %426 = vmatpush.bf16.xpose.msra.mxu0 0
        %427 = vmatpush.bf16.xpose.msra.mxu0 0
        %428 = vmatpush.bf16.xpose.msra.mxu0 0
        %429 = vmatpush.bf16.xpose.msra.mxu0 0
        %430 = vmatpush.bf16.xpose.msra.mxu0 %v355
        %431 = vmatmul.bf16.gmra.mxu0 %v421
        %v432 = vpop.f32.mrf.mxu0
        %v433 = vadd.f32 %v418, %v432
        %v434 = vpop.f32.mrf.mxu0
        %435 = vdwg.mxu0
        %v436 = vpack.c.bf16 %v433, %v433
        %s437 = scalar_lea.vmem %s318, 4 [#allocation2]
        %438 = vst.msk [vmem:[%s437] sm:$0xf] %vm371, %v436
        %s439 = scalar_lea.vmem %s3, 16
        %v440 = vld [vmem:[%s439] sm:$0xf]
        %v441 = vld [vmem:[%s439 + $0x4] sm:$0xf]
        %v442 = vld [vmem:[%s439 + $0x8] sm:$0xf]
        %v443 = vld [vmem:[%s439 + $0xc] sm:$0xf]
        %s444 = scalar_lea.vmem %s5, 1
        %v445 = vld [vmem:[%s444] sm:$0x1]
        %v447 = vperm.slane %v445, 0
        %v453 = vunpack.c.l.b16 %v440
        %v454 = vunpack.c.l.b16 %v441
        %v455 = vunpack.c.l.b16 %v442
        %v456 = vunpack.c.l.b16 %v443
        %v457 = vpack.c.b16 %v454, %v453
        %v458 = vpack.c.b16 %v456, %v455
        %461 = vmatpush.bf16.msra.mxu0 0
        %462 = vmatpush.bf16.msra.mxu0 0
        %463 = vmatpush.bf16.msra.mxu0 0
        %464 = vmatpush.bf16.msra.mxu0 0
        %465 = vmatpush.bf16.msra.mxu0 0
        %466 = vmatpush.bf16.msra.mxu0 0
        %467 = vmatpush.bf16.msra.mxu0 %v458
        %468 = vmatpush.bf16.msra.mxu0 %v457
        %469 = vmatmul.bf16.gmra.mxu0 %v394
        %v470 = vpop.f32.mrf.mxu0
        %v471 = vadd.f32 %v447, %v470
        %v472 = vpop.f32.mrf.mxu0
        %473 = vdwg.mxu0
        %v474 = vpack.c.bf16 %v471, %v471
        %s475 = scalar_lea.vmem %s325, 4 [#allocation4]
        %476 = vst.msk [vmem:[%s475] sm:$0xf] %vm371, %v474
        %s477 = scalar_lea.vmem %s2, 8
        %v478 = vld [vmem:[%s477] sm:$0xf]
        %s479 = scalar_lea.vmem %s4, 16
        %v480 = vld [vmem:[%s479] sm:$0xff]
        %482 = vset.pattern.permute.xlu0 0
        %483 = vperm.xlu0 %482, %v480
        %v484 = vpop.permute.xlu0 %483
        %v487 = vsel %vm350, %v478, 0
        %489 = vmatpush.bf16.xpose.msra.mxu0 0
        %490 = vmatpush.bf16.xpose.msra.mxu0 0
        %491 = vmatpush.bf16.xpose.msra.mxu0 0
        %492 = vmatpush.bf16.xpose.msra.mxu0 0
        %493 = vmatpush.bf16.xpose.msra.mxu0 0
        %494 = vmatpush.bf16.xpose.msra.mxu0 0
        %495 = vmatpush.bf16.xpose.msra.mxu0 0
        %496 = vmatpush.bf16.xpose.msra.mxu0 %v355
        %497 = vmatmul.bf16.gmra.mxu0 %v487
        %v498 = vpop.f32.mrf.mxu0
        %v499 = vadd.f32 %v484, %v498
        %v500 = vpop.f32.mrf.mxu0
        %501 = vdwg.mxu0
        %v502 = vpack.c.bf16 %v499, %v499
        %s503 = scalar_lea.vmem %s318, 8 [#allocation2]
        %504 = vst.msk [vmem:[%s503] sm:$0xf] %vm371, %v502
        %s505 = scalar_lea.vmem %s3, 32
        %v506 = vld [vmem:[%s505] sm:$0xf]
        %v507 = vld [vmem:[%s505 + $0x4] sm:$0xf]
        %v508 = vld [vmem:[%s505 + $0x8] sm:$0xf]
        %v509 = vld [vmem:[%s505 + $0xc] sm:$0xf]
        %s510 = scalar_lea.vmem %s5, 2
        %v511 = vld [vmem:[%s510] sm:$0x1]
        %v513 = vperm.slane %v511, 0
        %v519 = vunpack.c.l.b16 %v506
        %v520 = vunpack.c.l.b16 %v507
        %v521 = vunpack.c.l.b16 %v508
        %v522 = vunpack.c.l.b16 %v509
        %v523 = vpack.c.b16 %v520, %v519
        %v524 = vpack.c.b16 %v522, %v521
        %527 = vmatpush.bf16.msra.mxu0 0
        %528 = vmatpush.bf16.msra.mxu0 0
        %529 = vmatpush.bf16.msra.mxu0 0
        %530 = vmatpush.bf16.msra.mxu0 0
        %531 = vmatpush.bf16.msra.mxu0 0
        %532 = vmatpush.bf16.msra.mxu0 0
        %533 = vmatpush.bf16.msra.mxu0 %v524
        %534 = vmatpush.bf16.msra.mxu0 %v523
        %535 = vmatmul.bf16.gmra.mxu0 %v394
        %v536 = vpop.f32.mrf.mxu0
        %v537 = vadd.f32 %v513, %v536
        %v538 = vpop.f32.mrf.mxu0
        %539 = vdwg.mxu0
        %v540 = vpack.c.bf16 %v537, %v537
        %s541 = scalar_lea.vmem %s325, 8 [#allocation4]
        %542 = vst.msk [vmem:[%s541] sm:$0xf] %vm371, %v540
        %s543 = scalar_lea.vmem %s2, 12
        %v544 = vld [vmem:[%s543] sm:$0xf]
        %s545 = scalar_lea.vmem %s4, 24
        %v546 = vld [vmem:[%s545] sm:$0xff]
        %548 = vset.pattern.permute.xlu0 0
        %549 = vperm.xlu0 %548, %v546
        %v550 = vpop.permute.xlu0 %549
        %v553 = vsel %vm350, %v544, 0
        %555 = vmatpush.bf16.xpose.msra.mxu0 0
        %556 = vmatpush.bf16.xpose.msra.mxu0 0
        %557 = vmatpush.bf16.xpose.msra.mxu0 0
        %558 = vmatpush.bf16.xpose.msra.mxu0 0
        %559 = vmatpush.bf16.xpose.msra.mxu0 0
        %560 = vmatpush.bf16.xpose.msra.mxu0 0
        %561 = vmatpush.bf16.xpose.msra.mxu0 0
        %562 = vmatpush.bf16.xpose.msra.mxu0 %v355
        %563 = vmatmul.bf16.gmra.mxu0 %v553
        %v564 = vpop.f32.mrf.mxu0
        %v565 = vadd.f32 %v550, %v564
        %v566 = vpop.f32.mrf.mxu0
        %567 = vdwg.mxu0
        %v568 = vpack.c.bf16 %v565, %v565
        %s569 = scalar_lea.vmem %s318, 12 [#allocation2]
        %570 = vst.msk [vmem:[%s569] sm:$0xf] %vm371, %v568
        %s571 = scalar_lea.vmem %s3, 48
        %v572 = vld [vmem:[%s571] sm:$0xf]
        %v573 = vld [vmem:[%s571 + $0x4] sm:$0xf]
        %v574 = vld [vmem:[%s571 + $0x8] sm:$0xf]
        %v575 = vld [vmem:[%s571 + $0xc] sm:$0xf]
        %s576 = scalar_lea.vmem %s5, 3
        %v577 = vld [vmem:[%s576] sm:$0x1]
        %v579 = vperm.slane %v577, 0
        %v585 = vunpack.c.l.b16 %v572
        %v586 = vunpack.c.l.b16 %v573
        %v587 = vunpack.c.l.b16 %v574
        %v588 = vunpack.c.l.b16 %v575
        %v589 = vpack.c.b16 %v586, %v585
        %v590 = vpack.c.b16 %v588, %v587
        %593 = vmatpush.bf16.msra.mxu0 0
        %594 = vmatpush.bf16.msra.mxu0 0
        %595 = vmatpush.bf16.msra.mxu0 0
        %596 = vmatpush.bf16.msra.mxu0 0
        %597 = vmatpush.bf16.msra.mxu0 0
        %598 = vmatpush.bf16.msra.mxu0 0
        %599 = vmatpush.bf16.msra.mxu0 %v590
        %600 = vmatpush.bf16.msra.mxu0 %v589
        %601 = vmatmul.bf16.gmra.mxu0 %v394
        %v602 = vpop.f32.mrf.mxu0
        %v603 = vadd.f32 %v579, %v602
        %v604 = vpop.f32.mrf.mxu0
        %605 = vdwg.mxu0
        %v606 = vpack.c.bf16 %v603, %v603
        %s607 = scalar_lea.vmem %s325, 12 [#allocation4]
        %608 = vst.msk [vmem:[%s607] sm:$0xf] %vm371, %v606
        %s609 = sand.u32 %s187, 1
        %s610 = scalar_lea.sflag [#allocation3], %s609
        %s611 = sand.u32 %s187, 1
        %s612 = smul.addr %s611, 16
        %s613 = scalar_lea.vmem [#allocation2], %s612
        %s614 = sand.u32 %s215, 1
        %s615 = scalar_lea.sflag [#allocation5], %s614
        %s616 = sand.u32 %s215, 1
        %s617 = smul.addr %s616, 16
        %s618 = scalar_lea.vmem [#allocation4], %s617
        // Predicated region
        $region45: #{tpu_custom_call.1} parent=43 // pred_check
          %p619 = pneg %p197
        $region46: #{tpu_custom_call.1} parent=43 // pred_check_branch
          %621 = sbr.rel (%p619) target = $region48
        $region47: #{tpu_custom_call.1} parent=43 // pred_region
          %623 = vsyncadd %s610, 0
          %s624 = smul.addr %s29, 4
          %s625 = sadd.s32 %s30, %s624
          %s626 = smul.addr %s625, 4
          %s627 = scalar_lea.hbm %s6, %s626
          %s628 = sshll.u32 %s613, 4
          %s629 = int_to_ptr.vmem [resolvable:$true] %s628
          %s630 = sshll.u32 %s627, 4
          %s631 = int_to_ptr.hbm [resolvable:$true] %s630
          %636 = dma.vmem_to_hbm [thread:$0]  %s629, 256, %s631, %s610, 64, 64, 4
        $region48: #{tpu_custom_call.1} parent=43 // pred_fallthru
          _
        // Predicated region
        $region49: #{tpu_custom_call.1} parent=43 // pred_check
          %p637 = pneg %p225
        $region50: #{tpu_custom_call.1} parent=43 // pred_check_branch
          %639 = sbr.rel (%p637) target = $region52
        $region51: #{tpu_custom_call.1} parent=43 // pred_region
          %641 = vsyncadd %s615, 0
          %s642 = smul.addr %s29, 4
          %s643 = sadd.s32 %s30, %s642
          %s644 = smul.addr %s643, 4
          %s645 = scalar_lea.hbm %s7, %s644
          %s646 = sshll.u32 %s618, 4
          %s647 = int_to_ptr.vmem [resolvable:$true] %s646
          %s648 = sshll.u32 %s645, 4
          %s649 = int_to_ptr.hbm [resolvable:$true] %s648
          %654 = dma.vmem_to_hbm [thread:$0]  %s647, 256, %s649, %s615, 64, 64, 4
        $region52: #{tpu_custom_call.1} parent=43 // pred_fallthru
          _
      $region44: #{tpu_custom_call.1} parent=5 // pred_fallthru
        _
      %p655 = scmp.le.s32.totalorder 2, %s20
      // Predicated region
      $region53: #{tpu_custom_call.1} parent=5 // pred_check
        %p656 = pneg %p655
      $region54: #{tpu_custom_call.1} parent=5 // pred_check_branch
        %658 = sbr.rel (%p656) target = $region56
      $region55: #{tpu_custom_call.1} parent=5 // pred_region
        %s659 = ssub.s32 %s20, 2
        // Predicated region
        $region57: #{tpu_custom_call.1} parent=55 // pred_check
          %p660 = pneg %p203
        $region58: #{tpu_custom_call.1} parent=55 // pred_check_branch
          %662 = sbr.rel (%p660) target = $region60
        $region59: #{tpu_custom_call.1} parent=55 // pred_region
          %s663 = sand.u32 %s188, 1
          %s664 = scalar_lea.sflag [#allocation3], %s663
          %s665 = sand.u32 %s188, 1
          %s666 = smul.addr %s665, 16
          %s667 = scalar_lea.vmem [#allocation2], %s666
          %669 = dma.done %s664, 256
        $region60: #{tpu_custom_call.1} parent=55 // pred_fallthru
          _
        // Predicated region
        $region61: #{tpu_custom_call.1} parent=55 // pred_check
          %p670 = pneg %p231
        $region62: #{tpu_custom_call.1} parent=55 // pred_check_branch
          %672 = sbr.rel (%p670) target = $region64
        $region63: #{tpu_custom_call.1} parent=55 // pred_region
          %s673 = sand.u32 %s216, 1
          %s674 = scalar_lea.sflag [#allocation5], %s673
          %s675 = sand.u32 %s216, 1
          %s676 = smul.addr %s675, 16
          %s677 = scalar_lea.vmem [#allocation4], %s676
          %679 = dma.done %s674, 256
        $region64: #{tpu_custom_call.1} parent=55 // pred_fallthru
          _
      $region56: #{tpu_custom_call.1} parent=5 // pred_fallthru
        _
    $region6: #{tpu_custom_call.1} parent=1 // loop_footer
      %s24 = sadd.s32 1, %s20
    $region7: #{tpu_custom_call.1} parent=1 // loop_footer_branch
      %19 = sbr.rel target = $region3
    $region8: #{tpu_custom_call.1} parent=1 // loop_exit
      _
    %680 = vsyncpa [#allocation3], 1
    %s681 = scalar_lea.sflag [#allocation3], 1
    %682 = vsyncpa %s681, 1
    %683 = vsyncpa [#allocation5], 1
    %s684 = scalar_lea.sflag [#allocation5], 1
    %685 = vsyncpa %s684, 1

// kernel: tpu_custom_call.1
$region0: #{tpu_custom_call.1}
  #allocation0 [shape = 'u32[]', space=smem, size = 0x4, offset = 0x4, fixed_abs, tag = 'smem constant byte address 0x4 - core index']
  #allocation1 [shape = 'u32[72,128]{1,0:T(1,128)}', space=vmem, size = 0x9000, scoped, tag = 'internal scratch']
  %s0 = inlined_call_operand.vmem [shape: bf16[2,8,32], index: 0, kind: input, shape index: {}]
  %s1 = inlined_call_operand.vmem [shape: bf16[2,8,32], index: 1, kind: input, shape index: {}]
  %s2 = inlined_call_operand.vmem [shape: bf16[4,8,32], index: 2, kind: input, shape index: {}]
  %s3 = inlined_call_operand.vmem [shape: bf16[4,32,8], index: 3, kind: input, shape index: {}]
  %s4 = inlined_call_operand.vmem [shape: f32[4,8,1], index: 4, kind: input, shape index: {}]
  %s5 = inlined_call_operand.vmem [shape: f32[4,1,8], index: 5, kind: input, shape index: {}]
  %s6 = inlined_call_operand.hbm [shape: bf16[2,4,8,8], index: 6, kind: output, shape index: {0}]
  %s7 = inlined_call_operand.hbm [shape: bf16[2,4,8,8], index: 7, kind: output, shape index: {1}]
  %8 = xla_tuple %s6, %s7
  %s9 = sld [smem:[#allocation0]]
  $region65: #{tpu_custom_call.1} parent=0
    _
  %s11 = ssub.s32 1, %s9
  %s12 = scalar_select 0, %s11, %s9
  $region1: #{tpu_custom_call.1} parent=0
    #allocation2 [shape = 'u8[16384]{0}', space=vmem, size = 0x4000, scoped, tag = 'output window, operand 0']
    #allocation3 [shape = 's32[2]{0}', space=sflag, size = 0x8, scoped, tag = 'scoped memory for tpu_custom_call.1']
    #allocation4 [shape = 'u8[16384]{0}', space=vmem, size = 0x4000, scoped, tag = 'output window, operand 1']
    #allocation5 [shape = 's32[2]{0}', space=sflag, size = 0x8, scoped, tag = 'scoped memory for tpu_custom_call.1']
    %13 = vsyncpa [#allocation3], 0
    %s14 = scalar_lea.sflag [#allocation3], 1
    %15 = vsyncpa %s14, 0
    %16 = vsyncpa [#allocation5], 0
    %s17 = scalar_lea.sflag [#allocation5], 1
    %18 = vsyncpa %s17, 0
    loop: start=0, step=1, limit=4
    $region2: #{tpu_custom_call.1} parent=1 // loop_pre_header
      _
    $region3: #{tpu_custom_call.1} parent=1 // loop_header
      %s20 = sphi 0, %s24
      %p21 = scmp.ge.s32.totalorder %s20, 4
      %s27 = sphi 0, %s39
      %s28 = sphi 0, %s35
      %s29 = sphi 0, %s27
      %s30 = sphi 0, %s28
      %s31 = sphi 0, %s29
      %s32 = sphi 0, %s30
      %s44 = sphi 0, %s46
      %s47 = sphi 0, %s44
      %s48 = sphi 0, %s47
      %s64 = sphi 0, %s48
      %s72 = sphi 0, %s74
      %s75 = sphi 0, %s72
      %s76 = sphi 0, %s75
      %s92 = sphi 0, %s76
      %s96 = sphi 0, %s96
      %s98 = sphi 0, %s96
      %s99 = sphi 0, %s98
      %s113 = sphi 0, %s99
      %s117 = sphi 0, %s117
      %s119 = sphi 0, %s117
      %s120 = sphi 0, %s119
      %s134 = sphi 0, %s120
      %s138 = sphi 0, %s138
      %s140 = sphi 0, %s138
      %s141 = sphi 0, %s140
      %s155 = sphi 0, %s141
      %s159 = sphi 0, %s159
      %s161 = sphi 0, %s159
      %s162 = sphi 0, %s161
      %s176 = sphi 0, %s162
      %s184 = sphi 0, %s186
      %s187 = sphi 0, %s184
      %s188 = sphi 0, %s187
      %s204 = sphi 0, %s188
      %s212 = sphi 0, %s214
      %s215 = sphi 0, %s212
      %s216 = sphi 0, %s215
      %s232 = sphi 0, %s216
    $region4: #{tpu_custom_call.1} parent=1 // loop_header_branch
      %23 = sbr.rel (%p21) target = $region8
    $region5: #{tpu_custom_call.1} parent=1 // loop_body
      %s25 = ssub.s32 %s20, 1
      %s26 = ssub.s32 %s20, 2
      %s33 = sadd.s32 1, %s28
      %p34 = scmp.ge.s32.totalorder %s33, 1
      %s35 = scalar_select %p34, 0, %s33
      %s36 = sadd.s32 1, %s27
      %s37 = scalar_select %p34, %s36, %s27
      %p38 = scmp.ge.s32.totalorder %s37, 2
      %s39 = scalar_select %p38, 0, %s37
      %s40 = ssub.s32 %s27, %s39
      %s41 = ssub.s32 %s28, %s35
      %s42 = sor.u32 %s40, %s41
      %p43 = scmp.eq.s32.totalorder %s42, 0
      %s45 = sadd.s32 %s44, 1
      %s46 = scalar_select %p43, %s44, %s45
      %p49 = pneg %p43
      %p50 = scmp.eq.s32.totalorder %s20, 1
      %p51 = por %p49, %p50
      %p52 = scmp.ne.s32.totalorder %s44, %s47
      %p53 = scmp.eq.s32.totalorder %s20, 0
      %p54 = por %p52, %p53
      %p55 = scmp.ne.s32.totalorder %s44, %s47
      %p56 = scmp.eq.s32.totalorder %s25, 1
      %p57 = por %p55, %p56
      %p58 = scmp.ne.s32.totalorder %s47, %s48
      %p59 = scmp.eq.s32.totalorder %s25, 0
      %p60 = por %p58, %p59
      %p61 = scmp.ne.s32.totalorder %s47, %s48
      %p62 = scmp.eq.s32.totalorder %s26, 1
      %p63 = por %p61, %p62
      %p65 = scmp.ne.s32.totalorder %s48, %s64
      %p66 = scmp.eq.s32.totalorder %s26, 0
      %p67 = por %p65, %p66
      %s68 = ssub.s32 %s27, %s39
      %s69 = ssub.s32 %s28, %s35
      %s70 = sor.u32 %s68, %s69
      %p71 = scmp.eq.s32.totalorder %s70, 0
      %s73 = sadd.s32 %s72, 1
      %s74 = scalar_select %p71, %s72, %s73
      %p77 = pneg %p71
      %p78 = scmp.eq.s32.totalorder %s20, 1
      %p79 = por %p77, %p78
      %p80 = scmp.ne.s32.totalorder %s72, %s75
      %p81 = scmp.eq.s32.totalorder %s20, 0
      %p82 = por %p80, %p81
      %p83 = scmp.ne.s32.totalorder %s72, %s75
      %p84 = scmp.eq.s32.totalorder %s25, 1
      %p85 = por %p83, %p84
      %p86 = scmp.ne.s32.totalorder %s75, %s76
      %p87 = scmp.eq.s32.totalorder %s25, 0
      %p88 = por %p86, %p87
      %p89 = scmp.ne.s32.totalorder %s75, %s76
      %p90 = scmp.eq.s32.totalorder %s26, 1
      %p91 = por %p89, %p90
      %p93 = scmp.ne.s32.totalorder %s76, %s92
      %p94 = scmp.eq.s32.totalorder %s26, 0
      %p95 = por %p93, %p94
      %s97 = sadd.s32 %s96, 1
      %p100 = scmp.eq.s32.totalorder %s20, 1
      %p101 = scmp.ne.s32.totalorder %s96, %s98
      %p102 = scmp.eq.s32.totalorder %s20, 0
      %p103 = por %p101, %p102
      %p104 = scmp.ne.s32.totalorder %s96, %s98
      %p105 = scmp.eq.s32.totalorder %s25, 1
      %p106 = por %p104, %p105
      %p107 = scmp.ne.s32.totalorder %s98, %s99
      %p108 = scmp.eq.s32.totalorder %s25, 0
      %p109 = por %p107, %p108
      %p110 = scmp.ne.s32.totalorder %s98, %s99
      %p111 = scmp.eq.s32.totalorder %s26, 1
      %p112 = por %p110, %p111
      %p114 = scmp.ne.s32.totalorder %s99, %s113
      %p115 = scmp.eq.s32.totalorder %s26, 0
      %p116 = por %p114, %p115
      %s118 = sadd.s32 %s117, 1
      %p121 = scmp.eq.s32.totalorder %s20, 1
      %p122 = scmp.ne.s32.totalorder %s117, %s119
      %p123 = scmp.eq.s32.totalorder %s20, 0
      %p124 = por %p122, %p123
      %p125 = scmp.ne.s32.totalorder %s117, %s119
      %p126 = scmp.eq.s32.totalorder %s25, 1
      %p127 = por %p125, %p126
      %p128 = scmp.ne.s32.totalorder %s119, %s120
      %p129 = scmp.eq.s32.totalorder %s25, 0
      %p130 = por %p128, %p129
      %p131 = scmp.ne.s32.totalorder %s119, %s120
      %p132 = scmp.eq.s32.totalorder %s26, 1
      %p133 = por %p131, %p132
      %p135 = scmp.ne.s32.totalorder %s120, %s134
      %p136 = scmp.eq.s32.totalorder %s26, 0
      %p137 = por %p135, %p136
      %s139 = sadd.s32 %s138, 1
      %p142 = scmp.eq.s32.totalorder %s20, 1
      %p143 = scmp.ne.s32.totalorder %s138, %s140
      %p144 = scmp.eq.s32.totalorder %s20, 0
      %p145 = por %p143, %p144
      %p146 = scmp.ne.s32.totalorder %s138, %s140
      %p147 = scmp.eq.s32.totalorder %s25, 1
      %p148 = por %p146, %p147
      %p149 = scmp.ne.s32.totalorder %s140, %s141
      %p150 = scmp.eq.s32.totalorder %s25, 0
      %p151 = por %p149, %p150
      %p152 = scmp.ne.s32.totalorder %s140, %s141
      %p153 = scmp.eq.s32.totalorder %s26, 1
      %p154 = por %p152, %p153
      %p156 = scmp.ne.s32.totalorder %s141, %s155
      %p157 = scmp.eq.s32.totalorder %s26, 0
      %p158 = por %p156, %p157
      %s160 = sadd.s32 %s159, 1
      %p163 = scmp.eq.s32.totalorder %s20, 1
      %p164 = scmp.ne.s32.totalorder %s159, %s161
      %p165 = scmp.eq.s32.totalorder %s20, 0
      %p166 = por %p164, %p165
      %p167 = scmp.ne.s32.totalorder %s159, %s161
      %p168 = scmp.eq.s32.totalorder %s25, 1
      %p169 = por %p167, %p168
      %p170 = scmp.ne.s32.totalorder %s161, %s162
      %p171 = scmp.eq.s32.totalorder %s25, 0
      %p172 = por %p170, %p171
      %p173 = scmp.ne.s32.totalorder %s161, %s162
      %p174 = scmp.eq.s32.totalorder %s26, 1
      %p175 = por %p173, %p174
      %p177 = scmp.ne.s32.totalorder %s162, %s176
      %p178 = scmp.eq.s32.totalorder %s26, 0
      %p179 = por %p177, %p178
      %s180 = ssub.s32 %s27, %s39
      %s181 = ssub.s32 %s28, %s35
      %s182 = sor.u32 %s180, %s181
      %p183 = scmp.eq.s32.totalorder %s182, 0
      %s185 = sadd.s32 %s184, 1
      %s186 = scalar_select %p183, %s184, %s185
      %p189 = pneg %p183
      %p190 = scmp.eq.s32.totalorder %s20, 1
      %p191 = por %p189, %p190
      %p192 = scmp.ne.s32.totalorder %s184, %s187
      %p193 = scmp.eq.s32.totalorder %s20, 0
      %p194 = por %p192, %p193
      %p195 = scmp.ne.s32.totalorder %s184, %s187
      %p196 = scmp.eq.s32.totalorder %s25, 1
      %p197 = por %p195, %p196
      %p198 = scmp.ne.s32.totalorder %s187, %s188
      %p199 = scmp.eq.s32.totalorder %s25, 0
      %p200 = por %p198, %p199
      %p201 = scmp.ne.s32.totalorder %s187, %s188
      %p202 = scmp.eq.s32.totalorder %s26, 1
      %p203 = por %p201, %p202
      %p205 = scmp.ne.s32.totalorder %s188, %s204
      %p206 = scmp.eq.s32.totalorder %s26, 0
      %p207 = por %p205, %p206
      %s208 = ssub.s32 %s27, %s39
      %s209 = ssub.s32 %s28, %s35
      %s210 = sor.u32 %s208, %s209
      %p211 = scmp.eq.s32.totalorder %s210, 0
      %s213 = sadd.s32 %s212, 1
      %s214 = scalar_select %p211, %s212, %s213
      %p217 = pneg %p211
      %p218 = scmp.eq.s32.totalorder %s20, 1
      %p219 = por %p217, %p218
      %p220 = scmp.ne.s32.totalorder %s212, %s215
      %p221 = scmp.eq.s32.totalorder %s20, 0
      %p222 = por %p220, %p221
      %p223 = scmp.ne.s32.totalorder %s212, %s215
      %p224 = scmp.eq.s32.totalorder %s25, 1
      %p225 = por %p223, %p224
      %p226 = scmp.ne.s32.totalorder %s215, %s216
      %p227 = scmp.eq.s32.totalorder %s25, 0
      %p228 = por %p226, %p227
      %p229 = scmp.ne.s32.totalorder %s215, %s216
      %p230 = scmp.eq.s32.totalorder %s26, 1
      %p231 = por %p229, %p230
      %p233 = scmp.ne.s32.totalorder %s216, %s232
      %p234 = scmp.eq.s32.totalorder %s26, 0
      %p235 = por %p233, %p234
      %p236 = scmp.le.s32.totalorder 1, %s20
      %p237 = scmp.lt.s32.totalorder %s20, 3
      %p238 = pnand %p236, %p237
      %p239 = pneg %p238
      // Predicated region
      $region9: #{tpu_custom_call.1} parent=5 // pred_check
        _
      $region10: #{tpu_custom_call.1} parent=5 // pred_check_branch
        %241 = sbr.rel (%p238) target = $region12
      $region11: #{tpu_custom_call.1} parent=5 // pred_region
        %s242 = ssub.s32 %s20, 1
        // Predicated region
        $region13: #{tpu_custom_call.1} parent=11 // pred_check
          %p243 = pneg %p109
        $region14: #{tpu_custom_call.1} parent=11 // pred_check_branch
          %245 = sbr.rel (%p243) target = $region16
        $region15: #{tpu_custom_call.1} parent=11 // pred_region
          _
        $region16: #{tpu_custom_call.1} parent=11 // pred_fallthru
          _
        // Predicated region
        $region17: #{tpu_custom_call.1} parent=11 // pred_check
          %p246 = pneg %p130
        $region18: #{tpu_custom_call.1} parent=11 // pred_check_branch
          %248 = sbr.rel (%p246) target = $region20
        $region19: #{tpu_custom_call.1} parent=11 // pred_region
          _
        $region20: #{tpu_custom_call.1} parent=11 // pred_fallthru
          _
        // Predicated region
        $region21: #{tpu_custom_call.1} parent=11 // pred_check
          %p249 = pneg %p151
        $region22: #{tpu_custom_call.1} parent=11 // pred_check_branch
          %251 = sbr.rel (%p249) target = $region24
        $region23: #{tpu_custom_call.1} parent=11 // pred_region
          _
        $region24: #{tpu_custom_call.1} parent=11 // pred_fallthru
          _
        // Predicated region
        $region25: #{tpu_custom_call.1} parent=11 // pred_check
          %p252 = pneg %p172
        $region26: #{tpu_custom_call.1} parent=11 // pred_check_branch
          %254 = sbr.rel (%p252) target = $region28
        $region27: #{tpu_custom_call.1} parent=11 // pred_region
          _
        $region28: #{tpu_custom_call.1} parent=11 // pred_fallthru
          _
      $region12: #{tpu_custom_call.1} parent=5 // pred_fallthru
        _
      %p255 = scmp.lt.s32.totalorder %s20, 2
      // Predicated region
      $region29: #{tpu_custom_call.1} parent=5 // pred_check
        %p256 = pneg %p255
      $region30: #{tpu_custom_call.1} parent=5 // pred_check_branch
        %258 = sbr.rel (%p256) target = $region32
      $region31: #{tpu_custom_call.1} parent=5 // pred_region
        // Predicated region
        $region33: #{tpu_custom_call.1} parent=31 // pred_check
          %p259 = pneg %p54
        $region34: #{tpu_custom_call.1} parent=31 // pred_check_branch
          %261 = sbr.rel (%p259) target = $region36
        $region35: #{tpu_custom_call.1} parent=31 // pred_region
          %p262 = scmp.lt.s32.totalorder %s27, 1
          %s263 = scalar_select %p262, %s27, 1
          %p264 = scmp.lt.s32.totalorder %s28, 0
          %s265 = scalar_select %p264, %s28, 0
          %s266 = sadd.s32 %s265, %s263
          %s267 = smul.addr %s266, 4
          %s268 = scalar_lea.vmem %s0, %s267
        $region36: #{tpu_custom_call.1} parent=31 // pred_fallthru
          _
        // Predicated region
        $region37: #{tpu_custom_call.1} parent=31 // pred_check
          %p269 = pneg %p82
        $region38: #{tpu_custom_call.1} parent=31 // pred_check_branch
          %271 = sbr.rel (%p269) target = $region40
        $region39: #{tpu_custom_call.1} parent=31 // pred_region
          %p272 = scmp.lt.s32.totalorder %s27, 1
          %s273 = scalar_select %p272, %s27, 1
          %p274 = scmp.lt.s32.totalorder %s28, 0
          %s275 = scalar_select %p274, %s28, 0
          %s276 = sadd.s32 %s275, %s273
          %s277 = smul.addr %s276, 4
          %s278 = scalar_lea.vmem %s1, %s277
        $region40: #{tpu_custom_call.1} parent=31 // pred_fallthru
          _
      $region32: #{tpu_custom_call.1} parent=5 // pred_fallthru
        _
      %p279 = scmp.le.s32.totalorder 1, %s20
      %p280 = scmp.lt.s32.totalorder %s20, 3
      %p281 = pnand %p279, %p280
      %p282 = pneg %p281
      // Predicated region
      $region41: #{tpu_custom_call.1} parent=5 // pred_check
        _
      $region42: #{tpu_custom_call.1} parent=5 // pred_check_branch
        %284 = sbr.rel (%p281) target = $region44
      $region43: #{tpu_custom_call.1} parent=5 // pred_region
        %s285 = ssub.s32 %s20, 1
        %p286 = scmp.lt.s32.totalorder %s29, 1
        %s287 = scalar_select %p286, %s29, 1
        %p288 = scmp.lt.s32.totalorder %s30, 0
        %s289 = scalar_select %p288, %s30, 0
        %s290 = sadd.s32 %s289, %s287
        %s291 = smul.addr %s290, 4
        %s292 = scalar_lea.vmem %s0, %s291
        %p293 = pneg %p60
        %p294 = pneg %p57
        %p295 = scmp.lt.s32.totalorder %s29, 1
        %s296 = scalar_select %p295, %s29, 1
        %p297 = scmp.lt.s32.totalorder %s30, 0
        %s298 = scalar_select %p297, %s30, 0
        %s299 = sadd.s32 %s298, %s296
        %s300 = smul.addr %s299, 4
        %s301 = scalar_lea.vmem %s1, %s300
        %p302 = pneg %p88
        %p303 = pneg %p85
        %p304 = pneg %p109
        %p305 = pneg %p106
        %p306 = pneg %p130
        %p307 = pneg %p127
        %p308 = pneg %p151
        %p309 = pneg %p148
        %p310 = pneg %p172
        %p311 = pneg %p169
        %p312 = pneg %p200
        %p313 = pneg %p197
        %s314 = sand.u32 %s187, 1
        %s315 = scalar_lea.sflag [#allocation3], %s314
        %s316 = sand.u32 %s187, 1
        %s317 = smul.addr %s316, 16
        %s318 = scalar_lea.vmem [#allocation2], %s317
        %p319 = pneg %p228
        %p320 = pneg %p225
        %s321 = sand.u32 %s215, 1
        %s322 = scalar_lea.sflag [#allocation5], %s321
        %s323 = sand.u32 %s215, 1
        %s324 = smul.addr %s323, 16
        %s325 = scalar_lea.vmem [#allocation4], %s324
        %p326 = scmp.lt.s32.totalorder %s29, 1
        %s327 = scalar_select %p326, %s29, 1
        %p328 = scmp.lt.s32.totalorder %s30, 0
        %s329 = scalar_select %p328, %s30, 0
        %s330 = sadd.s32 %s329, %s327
        %s331 = smul.addr %s330, 4
        %s332 = scalar_lea.vmem %s0, %s331
        %p333 = scmp.lt.s32.totalorder %s29, 1
        %s334 = scalar_select %p333, %s29, 1
        %p335 = scmp.lt.s32.totalorder %s30, 0
        %s336 = scalar_select %p335, %s30, 0
        %s337 = sadd.s32 %s336, %s334
        %s338 = smul.addr %s337, 4
        %s339 = scalar_lea.vmem %s1, %s338
        %v341 = vld [vmem:[%s332] sm:$0xf]
        %v342 = vld [vmem:[%s339] sm:$0xf]
        %v343 = vld [vmem:[%s2] sm:$0xf]
        %v344 = vld [vmem:[%s4] sm:$0xff]
        %346 = vset.pattern.permute.xlu0 0
        %347 = vperm.xlu0 %346, %v344
        %v348 = vpop.permute.xlu0 %347
        %vm350 = vcmask 261120
        %v352 = vsel %vm350, %v343, 0
        %v355 = vsel %vm350, %v341, 0
        %357 = vmatpush.bf16.xpose.msra.mxu0 0
        %358 = vmatpush.bf16.xpose.msra.mxu0 0
        %359 = vmatpush.bf16.xpose.msra.mxu0 0
        %360 = vmatpush.bf16.xpose.msra.mxu0 0
        %361 = vmatpush.bf16.xpose.msra.mxu0 0
        %362 = vmatpush.bf16.xpose.msra.mxu0 0
        %363 = vmatpush.bf16.xpose.msra.mxu0 0
        %364 = vmatpush.bf16.xpose.msra.mxu0 %v355
        %365 = vmatmul.bf16.gmra.mxu0 %v352
        %v366 = vpop.f32.mrf.mxu0
        %v367 = vadd.f32 %v348, %v366
        %v368 = vpop.f32.mrf.mxu0
        %369 = vdwg.mxu0
        %v370 = vpack.c.bf16 %v367, %v367
        %vm371 = vcmask 60416
        %372 = vst.msk [vmem:[%s318] sm:$0xf] %vm371, %v370
        %v373 = vld [vmem:[%s3] sm:$0xf]
        %v374 = vld [vmem:[%s3 + $0x4] sm:$0xf]
        %v375 = vld [vmem:[%s3 + $0x8] sm:$0xf]
        %v376 = vld [vmem:[%s3 + $0xc] sm:$0xf]
        %v377 = vld [vmem:[%s5] sm:$0x1]
        %v379 = vperm.slane %v377, 0
        %v385 = vunpack.c.l.b16 %v373
        %v386 = vunpack.c.l.b16 %v374
        %v387 = vunpack.c.l.b16 %v375
        %v388 = vunpack.c.l.b16 %v376
        %v389 = vpack.c.b16 %v386, %v385
        %v390 = vpack.c.b16 %v388, %v387
        %v394 = vsel %vm350, %v342, 0
        %396 = vmatpush.bf16.msra.mxu0 0
        %397 = vmatpush.bf16.msra.mxu0 0
        %398 = vmatpush.bf16.msra.mxu0 0
        %399 = vmatpush.bf16.msra.mxu0 0
        %400 = vmatpush.bf16.msra.mxu0 0
        %401 = vmatpush.bf16.msra.mxu0 0
        %402 = vmatpush.bf16.msra.mxu0 %v390
        %403 = vmatpush.bf16.msra.mxu0 %v389
        %404 = vmatmul.bf16.gmra.mxu0 %v394
        %v405 = vpop.f32.mrf.mxu0
        %v406 = vadd.f32 %v379, %v405
        %v407 = vpop.f32.mrf.mxu0
        %408 = vdwg.mxu0
        %v409 = vpack.c.bf16 %v406, %v406
        %410 = vst.msk [vmem:[%s325] sm:$0xf] %vm371, %v409
        %s411 = scalar_lea.vmem %s2, 4
        %v412 = vld [vmem:[%s411] sm:$0xf]
        %s413 = scalar_lea.vmem %s4, 8
        %v414 = vld [vmem:[%s413] sm:$0xff]
        %416 = vset.pattern.permute.xlu0 0
        %417 = vperm.xlu0 %416, %v414
        %v418 = vpop.permute.xlu0 %417
        %v421 = vsel %vm350, %v412, 0
        %423 = vmatpush.bf16.xpose.msra.mxu0 0
        %424 = vmatpush.bf16.xpose.msra.mxu0 0
        %425 = vmatpush.bf16.xpose.msra.mxu0 0
        %426 = vmatpush.bf16.xpose.msra.mxu0 0
        %427 = vmatpush.bf16.xpose.msra.mxu0 0
        %428 = vmatpush.bf16.xpose.msra.mxu0 0
        %429 = vmatpush.bf16.xpose.msra.mxu0 0
        %430 = vmatpush.bf16.xpose.msra.mxu0 %v355
        %431 = vmatmul.bf16.gmra.mxu0 %v421
        %v432 = vpop.f32.mrf.mxu0
        %v433 = vadd.f32 %v418, %v432
        %v434 = vpop.f32.mrf.mxu0
        %435 = vdwg.mxu0
        %v436 = vpack.c.bf16 %v433, %v433
        %s437 = scalar_lea.vmem %s318, 4 [#allocation2]
        %438 = vst.msk [vmem:[%s437] sm:$0xf] %vm371, %v436
        %s439 = scalar_lea.vmem %s3, 16
        %v440 = vld [vmem:[%s439] sm:$0xf]
        %v441 = vld [vmem:[%s439 + $0x4] sm:$0xf]
        %v442 = vld [vmem:[%s439 + $0x8] sm:$0xf]
        %v443 = vld [vmem:[%s439 + $0xc] sm:$0xf]
        %s444 = scalar_lea.vmem %s5, 1
        %v445 = vld [vmem:[%s444] sm:$0x1]
        %v447 = vperm.slane %v445, 0
        %v453 = vunpack.c.l.b16 %v440
        %v454 = vunpack.c.l.b16 %v441
        %v455 = vunpack.c.l.b16 %v442
        %v456 = vunpack.c.l.b16 %v443
        %v457 = vpack.c.b16 %v454, %v453
        %v458 = vpack.c.b16 %v456, %v455
        %461 = vmatpush.bf16.msra.mxu0 0
        %462 = vmatpush.bf16.msra.mxu0 0
        %463 = vmatpush.bf16.msra.mxu0 0
        %464 = vmatpush.bf16.msra.mxu0 0
        %465 = vmatpush.bf16.msra.mxu0 0
        %466 = vmatpush.bf16.msra.mxu0 0
        %467 = vmatpush.bf16.msra.mxu0 %v458
        %468 = vmatpush.bf16.msra.mxu0 %v457
        %469 = vmatmul.bf16.gmra.mxu0 %v394
        %v470 = vpop.f32.mrf.mxu0
        %v471 = vadd.f32 %v447, %v470
        %v472 = vpop.f32.mrf.mxu0
        %473 = vdwg.mxu0
        %v474 = vpack.c.bf16 %v471, %v471
        %s475 = scalar_lea.vmem %s325, 4 [#allocation4]
        %476 = vst.msk [vmem:[%s475] sm:$0xf] %vm371, %v474
        %s477 = scalar_lea.vmem %s2, 8
        %v478 = vld [vmem:[%s477] sm:$0xf]
        %s479 = scalar_lea.vmem %s4, 16
        %v480 = vld [vmem:[%s479] sm:$0xff]
        %482 = vset.pattern.permute.xlu0 0
        %483 = vperm.xlu0 %482, %v480
        %v484 = vpop.permute.xlu0 %483
        %v487 = vsel %vm350, %v478, 0
        %489 = vmatpush.bf16.xpose.msra.mxu0 0
        %490 = vmatpush.bf16.xpose.msra.mxu0 0
        %491 = vmatpush.bf16.xpose.msra.mxu0 0
        %492 = vmatpush.bf16.xpose.msra.mxu0 0
        %493 = vmatpush.bf16.xpose.msra.mxu0 0
        %494 = vmatpush.bf16.xpose.msra.mxu0 0
        %495 = vmatpush.bf16.xpose.msra.mxu0 0
        %496 = vmatpush.bf16.xpose.msra.mxu0 %v355
        %497 = vmatmul.bf16.gmra.mxu0 %v487
        %v498 = vpop.f32.mrf.mxu0
        %v499 = vadd.f32 %v484, %v498
        %v500 = vpop.f32.mrf.mxu0
        %501 = vdwg.mxu0
        %v502 = vpack.c.bf16 %v499, %v499
        %s503 = scalar_lea.vmem %s318, 8 [#allocation2]
        %504 = vst.msk [vmem:[%s503] sm:$0xf] %vm371, %v502
        %s505 = scalar_lea.vmem %s3, 32
        %v506 = vld [vmem:[%s505] sm:$0xf]
        %v507 = vld [vmem:[%s505 + $0x4] sm:$0xf]
        %v508 = vld [vmem:[%s505 + $0x8] sm:$0xf]
        %v509 = vld [vmem:[%s505 + $0xc] sm:$0xf]
        %s510 = scalar_lea.vmem %s5, 2
        %v511 = vld [vmem:[%s510] sm:$0x1]
        %v513 = vperm.slane %v511, 0
        %v519 = vunpack.c.l.b16 %v506
        %v520 = vunpack.c.l.b16 %v507
        %v521 = vunpack.c.l.b16 %v508
        %v522 = vunpack.c.l.b16 %v509
        %v523 = vpack.c.b16 %v520, %v519
        %v524 = vpack.c.b16 %v522, %v521
        %527 = vmatpush.bf16.msra.mxu0 0
        %528 = vmatpush.bf16.msra.mxu0 0
        %529 = vmatpush.bf16.msra.mxu0 0
        %530 = vmatpush.bf16.msra.mxu0 0
        %531 = vmatpush.bf16.msra.mxu0 0
        %532 = vmatpush.bf16.msra.mxu0 0
        %533 = vmatpush.bf16.msra.mxu0 %v524
        %534 = vmatpush.bf16.msra.mxu0 %v523
        %535 = vmatmul.bf16.gmra.mxu0 %v394
        %v536 = vpop.f32.mrf.mxu0
        %v537 = vadd.f32 %v513, %v536
        %v538 = vpop.f32.mrf.mxu0
        %539 = vdwg.mxu0
        %v540 = vpack.c.bf16 %v537, %v537
        %s541 = scalar_lea.vmem %s325, 8 [#allocation4]
        %542 = vst.msk [vmem:[%s541] sm:$0xf] %vm371, %v540
        %s543 = scalar_lea.vmem %s2, 12
        %v544 = vld [vmem:[%s543] sm:$0xf]
        %s545 = scalar_lea.vmem %s4, 24
        %v546 = vld [vmem:[%s545] sm:$0xff]
        %548 = vset.pattern.permute.xlu0 0
        %549 = vperm.xlu0 %548, %v546
        %v550 = vpop.permute.xlu0 %549
        %v553 = vsel %vm350, %v544, 0
        %555 = vmatpush.bf16.xpose.msra.mxu0 0
        %556 = vmatpush.bf16.xpose.msra.mxu0 0
        %557 = vmatpush.bf16.xpose.msra.mxu0 0
        %558 = vmatpush.bf16.xpose.msra.mxu0 0
        %559 = vmatpush.bf16.xpose.msra.mxu0 0
        %560 = vmatpush.bf16.xpose.msra.mxu0 0
        %561 = vmatpush.bf16.xpose.msra.mxu0 0
        %562 = vmatpush.bf16.xpose.msra.mxu0 %v355
        %563 = vmatmul.bf16.gmra.mxu0 %v553
        %v564 = vpop.f32.mrf.mxu0
        %v565 = vadd.f32 %v550, %v564
        %v566 = vpop.f32.mrf.mxu0
        %567 = vdwg.mxu0
        %v568 = vpack.c.bf16 %v565, %v565
        %s569 = scalar_lea.vmem %s318, 12 [#allocation2]
        %570 = vst.msk [vmem:[%s569] sm:$0xf] %vm371, %v568
        %s571 = scalar_lea.vmem %s3, 48
        %v572 = vld [vmem:[%s571] sm:$0xf]
        %v573 = vld [vmem:[%s571 + $0x4] sm:$0xf]
        %v574 = vld [vmem:[%s571 + $0x8] sm:$0xf]
        %v575 = vld [vmem:[%s571 + $0xc] sm:$0xf]
        %s576 = scalar_lea.vmem %s5, 3
        %v577 = vld [vmem:[%s576] sm:$0x1]
        %v579 = vperm.slane %v577, 0
        %v585 = vunpack.c.l.b16 %v572
        %v586 = vunpack.c.l.b16 %v573
        %v587 = vunpack.c.l.b16 %v574
        %v588 = vunpack.c.l.b16 %v575
        %v589 = vpack.c.b16 %v586, %v585
        %v590 = vpack.c.b16 %v588, %v587
        %593 = vmatpush.bf16.msra.mxu0 0
        %594 = vmatpush.bf16.msra.mxu0 0
        %595 = vmatpush.bf16.msra.mxu0 0
        %596 = vmatpush.bf16.msra.mxu0 0
        %597 = vmatpush.bf16.msra.mxu0 0
        %598 = vmatpush.bf16.msra.mxu0 0
        %599 = vmatpush.bf16.msra.mxu0 %v590
        %600 = vmatpush.bf16.msra.mxu0 %v589
        %601 = vmatmul.bf16.gmra.mxu0 %v394
        %v602 = vpop.f32.mrf.mxu0
        %v603 = vadd.f32 %v579, %v602
        %v604 = vpop.f32.mrf.mxu0
        %605 = vdwg.mxu0
        %v606 = vpack.c.bf16 %v603, %v603
        %s607 = scalar_lea.vmem %s325, 12 [#allocation4]
        %608 = vst.msk [vmem:[%s607] sm:$0xf] %vm371, %v606
        %s609 = sand.u32 %s187, 1
        %s610 = scalar_lea.sflag [#allocation3], %s609
        %s611 = sand.u32 %s187, 1
        %s612 = smul.addr %s611, 16
        %s613 = scalar_lea.vmem [#allocation2], %s612
        %s614 = sand.u32 %s215, 1
        %s615 = scalar_lea.sflag [#allocation5], %s614
        %s616 = sand.u32 %s215, 1
        %s617 = smul.addr %s616, 16
        %s618 = scalar_lea.vmem [#allocation4], %s617
        // Predicated region
        $region45: #{tpu_custom_call.1} parent=43 // pred_check
          %p619 = pneg %p197
        $region46: #{tpu_custom_call.1} parent=43 // pred_check_branch
          %621 = sbr.rel (%p619) target = $region48
        $region47: #{tpu_custom_call.1} parent=43 // pred_region
          %623 = vsyncadd %s610, 0
          %s624 = smul.addr %s29, 4
          %s625 = sadd.s32 %s30, %s624
          %s626 = smul.addr %s625, 4
          %s627 = scalar_lea.hbm %s6, %s626
          %s628 = sshll.u32 %s613, 4
          %s629 = int_to_ptr.vmem [resolvable:$true] %s628
          %s630 = sshll.u32 %s627, 4
          %s631 = int_to_ptr.hbm [resolvable:$true] %s630
          %636 = dma.vmem_to_hbm [thread:$0]  %s629, 256, %s631, %s610, 64, 64, 4
        $region48: #{tpu_custom_call.1} parent=43 // pred_fallthru
          _
        // Predicated region
        $region49: #{tpu_custom_call.1} parent=43 // pred_check
          %p637 = pneg %p225
        $region50: #{tpu_custom_call.1} parent=43 // pred_check_branch
          %639 = sbr.rel (%p637) target = $region52
        $region51: #{tpu_custom_call.1} parent=43 // pred_region
          %641 = vsyncadd %s615, 0
          %s642 = smul.addr %s29, 4
          %s643 = sadd.s32 %s30, %s642
          %s644 = smul.addr %s643, 4
          %s645 = scalar_lea.hbm %s7, %s644
          %s646 = sshll.u32 %s618, 4
          %s647 = int_to_ptr.vmem [resolvable:$true] %s646
          %s648 = sshll.u32 %s645, 4
          %s649 = int_to_ptr.hbm [resolvable:$true] %s648
          %654 = dma.vmem_to_hbm [thread:$0]  %s647, 256, %s649, %s615, 64, 64, 4
        $region52: #{tpu_custom_call.1} parent=43 // pred_fallthru
          _
      $region44: #{tpu_custom_call.1} parent=5 // pred_fallthru
        _
      %p655 = scmp.le.s32.totalorder 2, %s20
      // Predicated region
      $region53: #{tpu_custom_call.1} parent=5 // pred_check
        %p656 = pneg %p655
      $region54: #{tpu_custom_call.1} parent=5 // pred_check_branch
        %658 = sbr.rel (%p656) target = $region56
      $region55: #{tpu_custom_call.1} parent=5 // pred_region
        %s659 = ssub.s32 %s20, 2
        // Predicated region
        $region57: #{tpu_custom_call.1} parent=55 // pred_check
          %p660 = pneg %p203
        $region58: #{tpu_custom_call.1} parent=55 // pred_check_branch
          %662 = sbr.rel (%p660) target = $region60
        $region59: #{tpu_custom_call.1} parent=55 // pred_region
          %s663 = sand.u32 %s188, 1
          %s664 = scalar_lea.sflag [#allocation3], %s663
          %s665 = sand.u32 %s188, 1
          %s666 = smul.addr %s665, 16
          %s667 = scalar_lea.vmem [#allocation2], %s666
          %669 = dma.done %s664, 256
        $region60: #{tpu_custom_call.1} parent=55 // pred_fallthru
          _
        // Predicated region
        $region61: #{tpu_custom_call.1} parent=55 // pred_check
          %p670 = pneg %p231
        $region62: #{tpu_custom_call.1} parent=55 // pred_check_branch
          %672 = sbr.rel (%p670) target = $region64
        $region63: #{tpu_custom_call.1} parent=55 // pred_region
          %s673 = sand.u32 %s216, 1
          %s674 = scalar_lea.sflag [#allocation5], %s673
          %s675 = sand.u32 %s216, 1
          %s676 = smul.addr %s675, 16
          %s677 = scalar_lea.vmem [#allocation4], %s676
          %679 = dma.done %s674, 256
        $region64: #{tpu_custom_call.1} parent=55 // pred_fallthru
          _
      $region56: #{tpu_custom_call.1} parent=5 // pred_fallthru
        _
    $region6: #{tpu_custom_call.1} parent=1 // loop_footer
      %s24 = sadd.s32 1, %s20
    $region7: #{tpu_custom_call.1} parent=1 // loop_footer_branch
      %19 = sbr.rel target = $region3
    $region8: #{tpu_custom_call.1} parent=1 // loop_exit
      _
    %680 = vsyncpa [#allocation3], 1
    %s681 = scalar_lea.sflag [#allocation3], 1
    %682 = vsyncpa %s681, 1
    %683 = vsyncpa [#allocation5], 1
    %s684 = scalar_lea.sflag [#allocation5], 1
    %685 = vsyncpa %s684, 1

</llo_original>
